<compile_context>
chip_gen: v6e
topology: v6e:2x2x1
jax: 0.10.0
libtpu: 0.0.40
codegen_flags: <defaults>
</compile_context>

<pallas_src>
import functools

import jax
import jax.numpy as jnp
from jax.experimental import pallas as pl
from jax.experimental.pallas import tpu as pltpu


# ----------------------------------------------------------------------------
# Pallas kernels: fused (matmul conv) + per-channel affine + ReLU (+ residual)
# ----------------------------------------------------------------------------
def _fused_conv_kernel(p_ref, w_ref, b_ref, o_ref):
    # p_ref: (9*Cin, HWt)  w_ref: (Cout, 9*Cin)  b_ref: (Cout, 1)  o_ref: (Cout, HWt)
    acc = jnp.dot(w_ref[...], p_ref[...], preferred_element_type=jnp.float32)
    acc = acc + b_ref[...]
    o_ref[...] = jnp.maximum(acc, 0.0).astype(o_ref.dtype)


def _fused_conv_residual_kernel(p_ref, w_ref, b_ref, r_ref, o_ref):
    acc = jnp.dot(w_ref[...], p_ref[...], preferred_element_type=jnp.float32)
    acc = acc + b_ref[...]
    acc = jnp.maximum(acc, 0.0)
    o_ref[...] = (acc + r_ref[...]).astype(o_ref.dtype)


def _pick_hw_tile(hw, max_tile=2048):
    """Largest multiple-of-128 divisor of hw that is <= max_tile (else full hw)."""
    if hw % 128 != 0:
        return hw  # full-extent block (legal, just lane-sparse)
    best = 128
    for t in range(128, min(hw, max_tile) + 1, 128):
        if hw % t == 0:
            best = t
    return best


def conv3x3_bn_relu(x, w, b_conv, bn_scale, bn_bias, dilation, residual=None):
    """relu( BN( conv3x3_dilated(x, w) + b_conv ) ) [+ residual], NCHW f32."""
    B, Cin, H, W = x.shape
    Cout = w.shape[0]
    d = int(dilation)
    HW = H * W
    K9 = 9 * Cin

    # --- wrapper-side layout plumbing: lane-dense (B, 9*Cin, H*W) patches ---
    xp = jnp.pad(x, ((0, 0), (0, 0), (d, d), (d, d)))
    taps = [xp[:, :, ky * d:ky * d + H, kx * d:kx * d + W]
            for ky in range(3) for kx in range(3)]
    patches = jnp.stack(taps, axis=1).reshape(B, K9, HW)

    # Fold conv bias + BN affine into the matmul weights / a single bias vector.
    w_eff = (w * bn_scale[:, None, None, None]).transpose(0, 2, 3, 1).reshape(Cout, K9)
    b_eff = (bn_scale * b_conv + bn_bias).reshape(Cout, 1).astype(jnp.float32)

    hw_t = _pick_hw_tile(HW)
    grid = (B, HW // hw_t)

    in_specs = [
        pl.BlockSpec((None, K9, hw_t), lambda b, t: (b, 0, t)),
        pl.BlockSpec((Cout, K9), lambda b, t: (0, 0)),
        pl.BlockSpec((Cout, 1), lambda b, t: (0, 0)),
    ]
    args = [patches, w_eff, b_eff]
    if residual is None:
        kernel = _fused_conv_kernel
    else:
        kernel = _fused_conv_residual_kernel
        in_specs.append(pl.BlockSpec((None, Cout, hw_t), lambda b, t: (b, 0, t)))
        args.append(residual.reshape(B, Cout, HW).astype(jnp.float32))

    out = pl.pallas_call(
        kernel,
        out_shape=jax.ShapeDtypeStruct((B, Cout, HW), jnp.float32),
        grid_spec=pltpu.PrefetchScalarGridSpec(
            num_scalar_prefetch=0,
            grid=grid,
            in_specs=in_specs,
            out_specs=pl.BlockSpec((None, Cout, hw_t), lambda b, t: (b, 0, t)),
        ),
        compiler_params=pltpu.CompilerParams(
            dimension_semantics=("parallel", "parallel"),
        ),
    )(*args)
    return out.reshape(B, Cout, H, W)


# ----------------------------------------------------------------------------
# Full ResASPP2_train forward using the fused Pallas kernel
# ----------------------------------------------------------------------------
_DIL = (1, 3, 5, 7)


def res_aspp2_forward(x, params):
    mid_ch = params["rebnconvin"]["w"].shape[0]
    q4 = mid_ch // 4
    q16 = mid_ch // 16

    def rebnconv(inp, name, dilation=1, residual=None):
        p = params[name]
        return conv3x3_bn_relu(inp, p["w"], p["b"], p["bn_s"], p["bn_o"],
                               dilation=dilation, residual=residual)

    residual = rebnconv(x, "residual")
    hxin = rebnconv(residual, "rebnconvin")

    # scale1_k convs fused with the k-th channel slice of rebn1's BN.
    r1s, r1o = params["rebn1"]["s"], params["rebn1"]["o"]
    scale1 = []
    for k in range(4):
        p = params[f"scale1_{k}"]
        sl = slice(k * q4, (k + 1) * q4)
        scale1.append(conv3x3_bn_relu(hxin, p["w"], p["b"], r1s[sl], r1o[sl],
                                      dilation=_DIL[k]))

    # scale2_{k}_{j} convs fused with rebn2 slices; regroup into chunk(4, 1).
    r2s, r2o = params["rebn2"]["s"], params["rebn2"]["o"]
    scale2_chunks = []
    for k in range(4):
        outs = []
        for j in range(4):
            idx = k * 4 + j
            p = params[f"scale2_{k}_{j}"]
            sl = slice(idx * q16, (idx + 1) * q16)
            outs.append(conv3x3_bn_relu(scale1[k], p["w"], p["b"],
                                        r2s[sl], r2o[sl], dilation=_DIL[j]))
        scale2_chunks.append(jnp.concatenate(outs, axis=1))  # (B, mid_ch//4, H, W)

    # scale1d_k convs on cat([scale1_k, scale2_chunk_k]) fused with rebn1d slices.
    rds, rdo = params["rebn1d"]["s"], params["rebn1d"]["o"]
    scale1d = []
    for k in range(4):
        p = params[f"scale1d_{k}"]
        sl = slice(k * q4, (k + 1) * q4)
        inp = jnp.concatenate([scale1[k], scale2_chunks[k]], axis=1)
        scale1d.append(conv3x3_bn_relu(inp, p["w"], p["b"], rds[sl], rdo[sl],
                                       dilation=_DIL[k]))

    # Output REBNCONV on cat([hxin, scale1d]) with the residual add fused in.
    inp = jnp.concatenate([hxin] + scale1d, axis=1)
    hxout = rebnconv(inp, "rebnconvout", dilation=1, residual=residual)
    return hxout


# ----------------------------------------------------------------------------
# Pure-JAX reference (mirrors the PyTorch module, BN in inference mode)
# ----------------------------------------------------------------------------
def _conv_ref(x, w, b, dilation):
    out = jax.lax.conv_general_dilated(
        x, w, window_strides=(1, 1),
        padding=((dilation, dilation), (dilation, dilation)),
        rhs_dilation=(dilation, dilation),
        dimension_numbers=("NCHW", "OIHW", "NCHW"),
        precision=jax.lax.Precision.HIGHEST)
    return out + b[None, :, None, None]


def _bn_relu_ref(x, s, o):
    return jnp.maximum(x * s[None, :, None, None] + o[None, :, None, None], 0.0)


def res_aspp2_reference(x, params):
    def rebnconv(inp, name):
        p = params[name]
        return _bn_relu_ref(_conv_ref(inp, p["w"], p["b"], 1), p["bn_s"], p["bn_o"])

    residual = rebnconv(x, "residual")
    hxin = rebnconv(residual, "rebnconvin")

    s1_raw = [_conv_ref(hxin, params[f"scale1_{k}"]["w"],
                        params[f"scale1_{k}"]["b"], _DIL[k]) for k in range(4)]
    scale1 = _bn_relu_ref(jnp.concatenate(s1_raw, 1),
                          params["rebn1"]["s"], params["rebn1"]["o"])
    q4 = scale1.shape[1] // 4
    s1_chunks = [scale1[:, k * q4:(k + 1) * q4] for k in range(4)]

    s2_raw = []
    for k in range(4):
        for j in range(4):
            p = params[f"scale2_{k}_{j}"]
            s2_raw.append(_conv_ref(s1_chunks[k], p["w"], p["b"], _DIL[j]))
    scale2 = _bn_relu_ref(jnp.concatenate(s2_raw, 1),
                          params["rebn2"]["s"], params["rebn2"]["o"])
    s2_chunks = [scale2[:, k * q4:(k + 1) * q4] for k in range(4)]

    s1d_raw = []
    for k in range(4):
        p = params[f"scale1d_{k}"]
        inp = jnp.concatenate([s1_chunks[k], s2_chunks[k]], 1)
        s1d_raw.append(_conv_ref(inp, p["w"], p["b"], _DIL[k]))
    scale1d = _bn_relu_ref(jnp.concatenate(s1d_raw, 1),
                           params["rebn1d"]["s"], params["rebn1d"]["o"])

    p = params["rebnconvout"]
    hxout = _bn_relu_ref(_conv_ref(jnp.concatenate([hxin, scale1d], 1),
                                   p["w"], p["b"], 1), p["bn_s"], p["bn_o"])
    return hxout + residual


# ----------------------------------------------------------------------------
# Parameter construction
# ----------------------------------------------------------------------------
def init_params(key, in_ch=3, mid_ch=16, out_ch=3):
    assert mid_ch % 16 == 0, "mid_ch must be divisible by 16 (mid_ch//16 conv channels)"
    keys = iter(jax.random.split(key, 256))

    def conv_p(cin, cout):
        return {"w": jax.random.normal(next(keys), (cout, cin, 3, 3), jnp.float32)
                      * (1.0 / jnp.sqrt(9.0 * cin)),
                "b": jax.random.normal(next(keys), (cout,), jnp.float32) * 0.05}

    def bn_p(c):
        return {"s": jax.random.uniform(next(keys), (c,), jnp.float32, 0.5, 1.5),
                "o": jax.random.normal(next(keys), (c,), jnp.float32) * 0.1}

    params = {}
    p, bn = conv_p(in_ch, out_ch), bn_p(out_ch)
    params["residual"] = {"w": p["w"], "b": p["b"], "bn_s": bn["s"], "bn_o": bn["o"]}
    p, bn = conv_p(out_ch, mid_ch), bn_p(mid_ch)
    params["rebnconvin"] = {"w": p["w"], "b": p["b"], "bn_s": bn["s"], "bn_o": bn["o"]}
    for k in range(4):
        params[f"scale1_{k}"] = conv_p(mid_ch, mid_ch // 4)
    params["rebn1"] = bn_p(mid_ch)
    for k in range(4):
        for j in range(4):
            params[f"scale2_{k}_{j}"] = conv_p(mid_ch // 4, mid_ch // 16)
    params["rebn2"] = bn_p(mid_ch)
    for k in range(4):
        params[f"scale1d_{k}"] = conv_p(mid_ch // 2, mid_ch // 4)
    params["rebn1d"] = bn_p(mid_ch)
    p, bn = conv_p(mid_ch * 2, out_ch), bn_p(out_ch)
    params["rebnconvout"] = {"w": p["w"], "b": p["b"], "bn_s": bn["s"], "bn_o": bn["o"]}
    return params


if __name__ == "__main__":
    key = jax.random.PRNGKey(0)
    k_p, k_x = jax.random.split(key)

    # Small shapes consistent with the module. Note: the PyTorch default
    # mid_ch=12 is not usable (mid_ch // 16 == 0 channels), so we use mid_ch=16.
    B, in_ch, mid_ch, out_ch, H, W = 2, 3, 16, 3, 16, 16
    params = init_params(k_p, in_ch=in_ch, mid_ch=mid_ch, out_ch=out_ch)
    x = jax.random.normal(k_x, (B, in_ch, H, W), jnp.float32)

    fwd = jax.jit(res_aspp2_forward)
    out = jax.block_until_ready(fwd(x, params))
    ref = jax.block_until_ready(jax.jit(res_aspp2_reference)(x, params))

    assert out.shape == (B, out_ch, H, W), out.shape
    assert bool(jnp.all(jnp.isfinite(out))), "non-finite output"
    max_err = float(jnp.max(jnp.abs(out - ref)))
    assert jnp.allclose(out, ref, rtol=2e-3, atol=2e-3), f"max abs err {max_err}"

    print("KERNEL_OK")
</pallas_src>

<mosaic_0001>
module attributes {stable_mosaic.version = 11 : i64} {
  func.func @_fused_conv_kernel(%arg0: i32, %arg1: i32, %arg2: memref<1x27x256xf32, #tpu.memory_space<vmem>>, %arg3: memref<3x27xf32, #tpu.memory_space<vmem>>, %arg4: memref<3x1xf32, #tpu.memory_space<vmem>>, %arg5: memref<1x3x256xf32, #tpu.memory_space<vmem>>) attributes {dimension_semantics = [#tpu.dimension_semantics<parallel>, #tpu.dimension_semantics<parallel>], iteration_bounds = array<i64: 2, 1>, scalar_prefetch = 0 : i64, scratch_operands = 0 : i64, tpu.core_type = #tpu.core_type<tc>, window_params = [{transform_indices = @transform_0, window_bounds = array<i64: 1, 27, 256>}, {pipeline_mode = #tpu.pipeline_mode<synchronous>, transform_indices = @transform_1, window_bounds = array<i64: 3, 27>}, {pipeline_mode = #tpu.pipeline_mode<synchronous>, transform_indices = @transform_2, window_bounds = array<i64: 3, 1>}, {transform_indices = @transform_3, window_bounds = array<i64: 1, 3, 256>}]} {
    %c0 = arith.constant 0 : index
    %c0_0 = arith.constant 0 : index
    %0 = vector.load %arg3[%c0, %c0_0] : memref<3x27xf32, #tpu.memory_space<vmem>>, vector<3x27xf32>
    %c0_1 = arith.constant 0 : index
    %c0_2 = arith.constant 0 : index
    %c0_3 = arith.constant 0 : index
    %1 = vector.load %arg2[%c0_1, %c0_2, %c0_3] : memref<1x27x256xf32, #tpu.memory_space<vmem>>, vector<1x27x256xf32>
    %2 = vector.shape_cast %1 : vector<1x27x256xf32> to vector<27x256xf32>
    %cst = arith.constant dense<0.000000e+00> : vector<3x256xf32>
    %3 = tpu.matmul %0, %2, %cst {dimension_numbers = #tpu.dot_dimension_numbers<[1], [0], [0], [1], [0, 0, 1, 1], [], []>} : vector<3x27xf32>, vector<27x256xf32>, vector<3x256xf32> -> vector<3x256xf32>
    %c0_4 = arith.constant 0 : index
    %c0_5 = arith.constant 0 : index
    %4 = vector.load %arg4[%c0_4, %c0_5] : memref<3x1xf32, #tpu.memory_space<vmem>>, vector<3x1xf32>
    %5 = vector.broadcast %4 : vector<3x1xf32> to vector<3x256xf32>
    %6 = arith.addf %3, %5 : vector<3x256xf32>
    %cst_6 = arith.constant 0.000000e+00 : f32
    %7 = vector.broadcast %cst_6 : f32 to vector<3x256xf32>
    %8 = arith.maximumf %6, %7 : vector<3x256xf32>
    %c0_7 = arith.constant 0 : index
    %c0_8 = arith.constant 0 : index
    %c0_9 = arith.constant 0 : index
    %9 = vector.load %arg5[%c0_7, %c0_8, %c0_9] : memref<1x3x256xf32, #tpu.memory_space<vmem>>, vector<1x3x256xf32>
    %10 = vector.shape_cast %9 : vector<1x3x256xf32> to vector<3x256xf32>
    %11 = vector.shape_cast %8 : vector<3x256xf32> to vector<1x3x256xf32>
    tpu.vector_store %arg5[%c0_7, %c0_8, %c0_9], %11 {strides = array<i32>} : memref<1x3x256xf32, #tpu.memory_space<vmem>>, vector<1x3x256xf32>,
    return
  }
  func.func @transform_0(%arg0: i32, %arg1: i32) -> (i32, i32, i32) {
    %c0_i32 = arith.constant 0 : i32
    %c0_i32_0 = arith.constant 0 : i32
    return %arg0, %c0_i32, %arg1 : i32, i32, i32
  }
  func.func @transform_1(%arg0: i32, %arg1: i32) -> (i32, i32) {
    %c0_i32 = arith.constant 0 : i32
    %c0_i32_0 = arith.constant 0 : i32
    %c0_i32_1 = arith.constant 0 : i32
    return %c0_i32, %c0_i32_0 : i32, i32
  }
  func.func @transform_2(%arg0: i32, %arg1: i32) -> (i32, i32) {
    %c0_i32 = arith.constant 0 : i32
    %c0_i32_0 = arith.constant 0 : i32
    %c0_i32_1 = arith.constant 0 : i32
    return %c0_i32, %c0_i32_0 : i32, i32
  }
  func.func @transform_3(%arg0: i32, %arg1: i32) -> (i32, i32, i32) {
    %c0_i32 = arith.constant 0 : i32
    %c0_i32_0 = arith.constant 0 : i32
    return %arg0, %c0_i32, %arg1 : i32, i32, i32
  }
}

module attributes {stable_mosaic.version = 11 : i64} {
  func.func @_fused_conv_kernel(%arg0: i32, %arg1: i32, %arg2: memref<1x27x256xf32, #tpu.memory_space<vmem>>, %arg3: memref<16x27xf32, #tpu.memory_space<vmem>>, %arg4: memref<16x1xf32, #tpu.memory_space<vmem>>, %arg5: memref<1x16x256xf32, #tpu.memory_space<vmem>>) attributes {dimension_semantics = [#tpu.dimension_semantics<parallel>, #tpu.dimension_semantics<parallel>], iteration_bounds = array<i64: 2, 1>, scalar_prefetch = 0 : i64, scratch_operands = 0 : i64, tpu.core_type = #tpu.core_type<tc>, window_params = [{transform_indices = @transform_0, window_bounds = array<i64: 1, 27, 256>}, {pipeline_mode = #tpu.pipeline_mode<synchronous>, transform_indices = @transform_1, window_bounds = array<i64: 16, 27>}, {pipeline_mode = #tpu.pipeline_mode<synchronous>, transform_indices = @transform_2, window_bounds = array<i64: 16, 1>}, {transform_indices = @transform_3, window_bounds = array<i64: 1, 16, 256>}]} {
    %c0 = arith.constant 0 : index
    %c0_0 = arith.constant 0 : index
    %0 = vector.load %arg3[%c0, %c0_0] : memref<16x27xf32, #tpu.memory_space<vmem>>, vector<16x27xf32>
    %c0_1 = arith.constant 0 : index
    %c0_2 = arith.constant 0 : index
    %c0_3 = arith.constant 0 : index
    %1 = vector.load %arg2[%c0_1, %c0_2, %c0_3] : memref<1x27x256xf32, #tpu.memory_space<vmem>>, vector<1x27x256xf32>
    %2 = vector.shape_cast %1 : vector<1x27x256xf32> to vector<27x256xf32>
    %cst = arith.constant dense<0.000000e+00> : vector<16x256xf32>
    %3 = tpu.matmul %0, %2, %cst {dimension_numbers = #tpu.dot_dimension_numbers<[1], [0], [0], [1], [0, 0, 1, 1], [], []>} : vector<16x27xf32>, vector<27x256xf32>, vector<16x256xf32> -> vector<16x256xf32>
    %c0_4 = arith.constant 0 : index
    %c0_5 = arith.constant 0 : index
    %4 = vector.load %arg4[%c0_4, %c0_5] : memref<16x1xf32, #tpu.memory_space<vmem>>, vector<16x1xf32>
    %5 = vector.broadcast %4 : vector<16x1xf32> to vector<16x256xf32>
    %6 = arith.addf %3, %5 : vector<16x256xf32>
    %cst_6 = arith.constant 0.000000e+00 : f32
    %7 = vector.broadcast %cst_6 : f32 to vector<16x256xf32>
    %8 = arith.maximumf %6, %7 : vector<16x256xf32>
    %c0_7 = arith.constant 0 : index
    %c0_8 = arith.constant 0 : index
    %c0_9 = arith.constant 0 : index
    %9 = vector.load %arg5[%c0_7, %c0_8, %c0_9] : memref<1x16x256xf32, #tpu.memory_space<vmem>>, vector<1x16x256xf32>
    %10 = vector.shape_cast %9 : vector<1x16x256xf32> to vector<16x256xf32>
    %11 = vector.shape_cast %8 : vector<16x256xf32> to vector<1x16x256xf32>
    tpu.vector_store %arg5[%c0_7, %c0_8, %c0_9], %11 {strides = array<i32>} : memref<1x16x256xf32, #tpu.memory_space<vmem>>, vector<1x16x256xf32>,
    return
  }
  func.func @transform_0(%arg0: i32, %arg1: i32) -> (i32, i32, i32) {
    %c0_i32 = arith.constant 0 : i32
    %c0_i32_0 = arith.constant 0 : i32
    return %arg0, %c0_i32, %arg1 : i32, i32, i32
  }
  func.func @transform_1(%arg0: i32, %arg1: i32) -> (i32, i32) {
    %c0_i32 = arith.constant 0 : i32
    %c0_i32_0 = arith.constant 0 : i32
    %c0_i32_1 = arith.constant 0 : i32
    return %c0_i32, %c0_i32_0 : i32, i32
  }
  func.func @transform_2(%arg0: i32, %arg1: i32) -> (i32, i32) {
    %c0_i32 = arith.constant 0 : i32
    %c0_i32_0 = arith.constant 0 : i32
    %c0_i32_1 = arith.constant 0 : i32
    return %c0_i32, %c0_i32_0 : i32, i32
  }
  func.func @transform_3(%arg0: i32, %arg1: i32) -> (i32, i32, i32) {
    %c0_i32 = arith.constant 0 : i32
    %c0_i32_0 = arith.constant 0 : i32
    return %arg0, %c0_i32, %arg1 : i32, i32, i32
  }
}

module attributes {stable_mosaic.version = 11 : i64} {
  func.func @_fused_conv_kernel(%arg0: i32, %arg1: i32, %arg2: memref<1x144x256xf32, #tpu.memory_space<vmem>>, %arg3: memref<4x144xf32, #tpu.memory_space<vmem>>, %arg4: memref<4x1xf32, #tpu.memory_space<vmem>>, %arg5: memref<1x4x256xf32, #tpu.memory_space<vmem>>) attributes {dimension_semantics = [#tpu.dimension_semantics<parallel>, #tpu.dimension_semantics<parallel>], iteration_bounds = array<i64: 2, 1>, scalar_prefetch = 0 : i64, scratch_operands = 0 : i64, tpu.core_type = #tpu.core_type<tc>, window_params = [{transform_indices = @transform_0, window_bounds = array<i64: 1, 144, 256>}, {pipeline_mode = #tpu.pipeline_mode<synchronous>, transform_indices = @transform_1, window_bounds = array<i64: 4, 144>}, {pipeline_mode = #tpu.pipeline_mode<synchronous>, transform_indices = @transform_2, window_bounds = array<i64: 4, 1>}, {transform_indices = @transform_3, window_bounds = array<i64: 1, 4, 256>}]} {
    %c0 = arith.constant 0 : index
    %c0_0 = arith.constant 0 : index
    %0 = vector.load %arg3[%c0, %c0_0] : memref<4x144xf32, #tpu.memory_space<vmem>>, vector<4x144xf32>
    %c0_1 = arith.constant 0 : index
    %c0_2 = arith.constant 0 : index
    %c0_3 = arith.constant 0 : index
    %1 = vector.load %arg2[%c0_1, %c0_2, %c0_3] : memref<1x144x256xf32, #tpu.memory_space<vmem>>, vector<1x144x256xf32>
    %2 = vector.shape_cast %1 : vector<1x144x256xf32> to vector<144x256xf32>
    %cst = arith.constant dense<0.000000e+00> : vector<4x256xf32>
    %3 = tpu.matmul %0, %2, %cst {dimension_numbers = #tpu.dot_dimension_numbers<[1], [0], [0], [1], [0, 0, 1, 1], [], []>} : vector<4x144xf32>, vector<144x256xf32>, vector<4x256xf32> -> vector<4x256xf32>
    %c0_4 = arith.constant 0 : index
    %c0_5 = arith.constant 0 : index
    %4 = vector.load %arg4[%c0_4, %c0_5] : memref<4x1xf32, #tpu.memory_space<vmem>>, vector<4x1xf32>
    %5 = vector.broadcast %4 : vector<4x1xf32> to vector<4x256xf32>
    %6 = arith.addf %3, %5 : vector<4x256xf32>
    %cst_6 = arith.constant 0.000000e+00 : f32
    %7 = vector.broadcast %cst_6 : f32 to vector<4x256xf32>
    %8 = arith.maximumf %6, %7 : vector<4x256xf32>
    %c0_7 = arith.constant 0 : index
    %c0_8 = arith.constant 0 : index
    %c0_9 = arith.constant 0 : index
    %9 = vector.load %arg5[%c0_7, %c0_8, %c0_9] : memref<1x4x256xf32, #tpu.memory_space<vmem>>, vector<1x4x256xf32>
    %10 = vector.shape_cast %9 : vector<1x4x256xf32> to vector<4x256xf32>
    %11 = vector.shape_cast %8 : vector<4x256xf32> to vector<1x4x256xf32>
    tpu.vector_store %arg5[%c0_7, %c0_8, %c0_9], %11 {strides = array<i32>} : memref<1x4x256xf32, #tpu.memory_space<vmem>>, vector<1x4x256xf32>,
    return
  }
  func.func @transform_0(%arg0: i32, %arg1: i32) -> (i32, i32, i32) {
    %c0_i32 = arith.constant 0 : i32
    %c0_i32_0 = arith.constant 0 : i32
    return %arg0, %c0_i32, %arg1 : i32, i32, i32
  }
  func.func @transform_1(%arg0: i32, %arg1: i32) -> (i32, i32) {
    %c0_i32 = arith.constant 0 : i32
    %c0_i32_0 = arith.constant 0 : i32
    %c0_i32_1 = arith.constant 0 : i32
    return %c0_i32, %c0_i32_0 : i32, i32
  }
  func.func @transform_2(%arg0: i32, %arg1: i32) -> (i32, i32) {
    %c0_i32 = arith.constant 0 : i32
    %c0_i32_0 = arith.constant 0 : i32
    %c0_i32_1 = arith.constant 0 : i32
    return %c0_i32, %c0_i32_0 : i32, i32
  }
  func.func @transform_3(%arg0: i32, %arg1: i32) -> (i32, i32, i32) {
    %c0_i32 = arith.constant 0 : i32
    %c0_i32_0 = arith.constant 0 : i32
    return %arg0, %c0_i32, %arg1 : i32, i32, i32
  }
}

module attributes {stable_mosaic.version = 11 : i64} {
  func.func @_fused_conv_kernel(%arg0: i32, %arg1: i32, %arg2: memref<1x36x256xf32, #tpu.memory_space<vmem>>, %arg3: memref<1x36xf32, #tpu.memory_space<vmem>>, %arg4: memref<1x1xf32, #tpu.memory_space<vmem>>, %arg5: memref<1x1x256xf32, #tpu.memory_space<vmem>>) attributes {dimension_semantics = [#tpu.dimension_semantics<parallel>, #tpu.dimension_semantics<parallel>], iteration_bounds = array<i64: 2, 1>, scalar_prefetch = 0 : i64, scratch_operands = 0 : i64, tpu.core_type = #tpu.core_type<tc>, window_params = [{transform_indices = @transform_0, window_bounds = array<i64: 1, 36, 256>}, {pipeline_mode = #tpu.pipeline_mode<synchronous>, transform_indices = @transform_1, window_bounds = array<i64: 1, 36>}, {pipeline_mode = #tpu.pipeline_mode<synchronous>, transform_indices = @transform_2, window_bounds = array<i64: 1, 1>}, {transform_indices = @transform_3, window_bounds = array<i64: 1, 1, 256>}]} {
    %c0 = arith.constant 0 : index
    %c0_0 = arith.constant 0 : index
    %0 = vector.load %arg3[%c0, %c0_0] : memref<1x36xf32, #tpu.memory_space<vmem>>, vector<1x36xf32>
    %c0_1 = arith.constant 0 : index
    %c0_2 = arith.constant 0 : index
    %c0_3 = arith.constant 0 : index
    %1 = vector.load %arg2[%c0_1, %c0_2, %c0_3] : memref<1x36x256xf32, #tpu.memory_space<vmem>>, vector<1x36x256xf32>
    %2 = vector.shape_cast %1 : vector<1x36x256xf32> to vector<36x256xf32>
    %cst = arith.constant dense<0.000000e+00> : vector<1x256xf32>
    %3 = tpu.matmul %0, %2, %cst {dimension_numbers = #tpu.dot_dimension_numbers<[1], [0], [0], [1], [0, 0, 1, 1], [], []>} : vector<1x36xf32>, vector<36x256xf32>, vector<1x256xf32> -> vector<1x256xf32>
    %c0_4 = arith.constant 0 : index
    %c0_5 = arith.constant 0 : index
    %4 = vector.load %arg4[%c0_4, %c0_5] : memref<1x1xf32, #tpu.memory_space<vmem>>, vector<1x1xf32>
    %5 = vector.broadcast %4 : vector<1x1xf32> to vector<1x256xf32>
    %6 = arith.addf %3, %5 : vector<1x256xf32>
    %cst_6 = arith.constant 0.000000e+00 : f32
    %7 = vector.broadcast %cst_6 : f32 to vector<1x256xf32>
    %8 = arith.maximumf %6, %7 : vector<1x256xf32>
    %c0_7 = arith.constant 0 : index
    %c0_8 = arith.constant 0 : index
    %c0_9 = arith.constant 0 : index
    %9 = vector.load %arg5[%c0_7, %c0_8, %c0_9] : memref<1x1x256xf32, #tpu.memory_space<vmem>>, vector<1x1x256xf32>
    %10 = vector.shape_cast %9 : vector<1x1x256xf32> to vector<1x256xf32>
    %11 = vector.shape_cast %8 : vector<1x256xf32> to vector<1x1x256xf32>
    tpu.vector_store %arg5[%c0_7, %c0_8, %c0_9], %11 {strides = array<i32>} : memref<1x1x256xf32, #tpu.memory_space<vmem>>, vector<1x1x256xf32>,
    return
  }
  func.func @transform_0(%arg0: i32, %arg1: i32) -> (i32, i32, i32) {
    %c0_i32 = arith.constant 0 : i32
    %c0_i32_0 = arith.constant 0 : i32
    return %arg0, %c0_i32, %arg1 : i32, i32, i32
  }
  func.func @transform_1(%arg0: i32, %arg1: i32) -> (i32, i32) {
    %c0_i32 = arith.constant 0 : i32
    %c0_i32_0 = arith.constant 0 : i32
    %c0_i32_1 = arith.constant 0 : i32
    return %c0_i32, %c0_i32_0 : i32, i32
  }
  func.func @transform_2(%arg0: i32, %arg1: i32) -> (i32, i32) {
    %c0_i32 = arith.constant 0 : i32
    %c0_i32_0 = arith.constant 0 : i32
    %c0_i32_1 = arith.constant 0 : i32
    return %c0_i32, %c0_i32_0 : i32, i32
  }
  func.func @transform_3(%arg0: i32, %arg1: i32) -> (i32, i32, i32) {
    %c0_i32 = arith.constant 0 : i32
    %c0_i32_0 = arith.constant 0 : i32
    return %arg0, %c0_i32, %arg1 : i32, i32, i32
  }
}

module attributes {stable_mosaic.version = 11 : i64} {
  func.func @_fused_conv_kernel(%arg0: i32, %arg1: i32, %arg2: memref<1x72x256xf32, #tpu.memory_space<vmem>>, %arg3: memref<4x72xf32, #tpu.memory_space<vmem>>, %arg4: memref<4x1xf32, #tpu.memory_space<vmem>>, %arg5: memref<1x4x256xf32, #tpu.memory_space<vmem>>) attributes {dimension_semantics = [#tpu.dimension_semantics<parallel>, #tpu.dimension_semantics<parallel>], iteration_bounds = array<i64: 2, 1>, scalar_prefetch = 0 : i64, scratch_operands = 0 : i64, tpu.core_type = #tpu.core_type<tc>, window_params = [{transform_indices = @transform_0, window_bounds = array<i64: 1, 72, 256>}, {pipeline_mode = #tpu.pipeline_mode<synchronous>, transform_indices = @transform_1, window_bounds = array<i64: 4, 72>}, {pipeline_mode = #tpu.pipeline_mode<synchronous>, transform_indices = @transform_2, window_bounds = array<i64: 4, 1>}, {transform_indices = @transform_3, window_bounds = array<i64: 1, 4, 256>}]} {
    %c0 = arith.constant 0 : index
    %c0_0 = arith.constant 0 : index
    %0 = vector.load %arg3[%c0, %c0_0] : memref<4x72xf32, #tpu.memory_space<vmem>>, vector<4x72xf32>
    %c0_1 = arith.constant 0 : index
    %c0_2 = arith.constant 0 : index
    %c0_3 = arith.constant 0 : index
    %1 = vector.load %arg2[%c0_1, %c0_2, %c0_3] : memref<1x72x256xf32, #tpu.memory_space<vmem>>, vector<1x72x256xf32>
    %2 = vector.shape_cast %1 : vector<1x72x256xf32> to vector<72x256xf32>
    %cst = arith.constant dense<0.000000e+00> : vector<4x256xf32>
    %3 = tpu.matmul %0, %2, %cst {dimension_numbers = #tpu.dot_dimension_numbers<[1], [0], [0], [1], [0, 0, 1, 1], [], []>} : vector<4x72xf32>, vector<72x256xf32>, vector<4x256xf32> -> vector<4x256xf32>
    %c0_4 = arith.constant 0 : index
    %c0_5 = arith.constant 0 : index
    %4 = vector.load %arg4[%c0_4, %c0_5] : memref<4x1xf32, #tpu.memory_space<vmem>>, vector<4x1xf32>
    %5 = vector.broadcast %4 : vector<4x1xf32> to vector<4x256xf32>
    %6 = arith.addf %3, %5 : vector<4x256xf32>
    %cst_6 = arith.constant 0.000000e+00 : f32
    %7 = vector.broadcast %cst_6 : f32 to vector<4x256xf32>
    %8 = arith.maximumf %6, %7 : vector<4x256xf32>
    %c0_7 = arith.constant 0 : index
    %c0_8 = arith.constant 0 : index
    %c0_9 = arith.constant 0 : index
    %9 = vector.load %arg5[%c0_7, %c0_8, %c0_9] : memref<1x4x256xf32, #tpu.memory_space<vmem>>, vector<1x4x256xf32>
    %10 = vector.shape_cast %9 : vector<1x4x256xf32> to vector<4x256xf32>
    %11 = vector.shape_cast %8 : vector<4x256xf32> to vector<1x4x256xf32>
    tpu.vector_store %arg5[%c0_7, %c0_8, %c0_9], %11 {strides = array<i32>} : memref<1x4x256xf32, #tpu.memory_space<vmem>>, vector<1x4x256xf32>,
    return
  }
  func.func @transform_0(%arg0: i32, %arg1: i32) -> (i32, i32, i32) {
    %c0_i32 = arith.constant 0 : i32
    %c0_i32_0 = arith.constant 0 : i32
    return %arg0, %c0_i32, %arg1 : i32, i32, i32
  }
  func.func @transform_1(%arg0: i32, %arg1: i32) -> (i32, i32) {
    %c0_i32 = arith.constant 0 : i32
    %c0_i32_0 = arith.constant 0 : i32
    %c0_i32_1 = arith.constant 0 : i32
    return %c0_i32, %c0_i32_0 : i32, i32
  }
  func.func @transform_2(%arg0: i32, %arg1: i32) -> (i32, i32) {
    %c0_i32 = arith.constant 0 : i32
    %c0_i32_0 = arith.constant 0 : i32
    %c0_i32_1 = arith.constant 0 : i32
    return %c0_i32, %c0_i32_0 : i32, i32
  }
  func.func @transform_3(%arg0: i32, %arg1: i32) -> (i32, i32, i32) {
    %c0_i32 = arith.constant 0 : i32
    %c0_i32_0 = arith.constant 0 : i32
    return %arg0, %c0_i32, %arg1 : i32, i32, i32
  }
}

module attributes {stable_mosaic.version = 11 : i64} {
  func.func @_fused_conv_residual_kernel(%arg0: i32, %arg1: i32, %arg2: memref<1x288x256xf32, #tpu.memory_space<vmem>>, %arg3: memref<3x288xf32, #tpu.memory_space<vmem>>, %arg4: memref<3x1xf32, #tpu.memory_space<vmem>>, %arg5: memref<1x3x256xf32, #tpu.memory_space<vmem>>, %arg6: memref<1x3x256xf32, #tpu.memory_space<vmem>>) attributes {dimension_semantics = [#tpu.dimension_semantics<parallel>, #tpu.dimension_semantics<parallel>], iteration_bounds = array<i64: 2, 1>, scalar_prefetch = 0 : i64, scratch_operands = 0 : i64, tpu.core_type = #tpu.core_type<tc>, window_params = [{transform_indices = @transform_0, window_bounds = array<i64: 1, 288, 256>}, {pipeline_mode = #tpu.pipeline_mode<synchronous>, transform_indices = @transform_1, window_bounds = array<i64: 3, 288>}, {pipeline_mode = #tpu.pipeline_mode<synchronous>, transform_indices = @transform_2, window_bounds = array<i64: 3, 1>}, {transform_indices = @transform_3, window_bounds = array<i64: 1, 3, 256>}, {transform_indices = @transform_4, window_bounds = array<i64: 1, 3, 256>}]} {
    %c0 = arith.constant 0 : index
    %c0_0 = arith.constant 0 : index
    %0 = vector.load %arg3[%c0, %c0_0] : memref<3x288xf32, #tpu.memory_space<vmem>>, vector<3x288xf32>
    %c0_1 = arith.constant 0 : index
    %c0_2 = arith.constant 0 : index
    %c0_3 = arith.constant 0 : index
    %1 = vector.load %arg2[%c0_1, %c0_2, %c0_3] : memref<1x288x256xf32, #tpu.memory_space<vmem>>, vector<1x288x256xf32>
    %2 = vector.shape_cast %1 : vector<1x288x256xf32> to vector<288x256xf32>
    %cst = arith.constant dense<0.000000e+00> : vector<3x256xf32>
    %3 = tpu.matmul %0, %2, %cst {dimension_numbers = #tpu.dot_dimension_numbers<[1], [0], [0], [1], [0, 0, 1, 1], [], []>} : vector<3x288xf32>, vector<288x256xf32>, vector<3x256xf32> -> vector<3x256xf32>
    %c0_4 = arith.constant 0 : index
    %c0_5 = arith.constant 0 : index
    %4 = vector.load %arg4[%c0_4, %c0_5] : memref<3x1xf32, #tpu.memory_space<vmem>>, vector<3x1xf32>
    %5 = vector.broadcast %4 : vector<3x1xf32> to vector<3x256xf32>
    %6 = arith.addf %3, %5 : vector<3x256xf32>
    %cst_6 = arith.constant 0.000000e+00 : f32
    %7 = vector.broadcast %cst_6 : f32 to vector<3x256xf32>
    %8 = arith.maximumf %6, %7 : vector<3x256xf32>
    %c0_7 = arith.constant 0 : index
    %c0_8 = arith.constant 0 : index
    %c0_9 = arith.constant 0 : index
    %9 = vector.load %arg5[%c0_7, %c0_8, %c0_9] : memref<1x3x256xf32, #tpu.memory_space<vmem>>, vector<1x3x256xf32>
    %10 = vector.shape_cast %9 : vector<1x3x256xf32> to vector<3x256xf32>
    %11 = arith.addf %8, %10 : vector<3x256xf32>
    %c0_10 = arith.constant 0 : index
    %c0_11 = arith.constant 0 : index
    %c0_12 = arith.constant 0 : index
    %12 = vector.load %arg6[%c0_10, %c0_11, %c0_12] : memref<1x3x256xf32, #tpu.memory_space<vmem>>, vector<1x3x256xf32>
    %13 = vector.shape_cast %12 : vector<1x3x256xf32> to vector<3x256xf32>
    %14 = vector.shape_cast %11 : vector<3x256xf32> to vector<1x3x256xf32>
    tpu.vector_store %arg6[%c0_10, %c0_11, %c0_12], %14 {strides = array<i32>} : memref<1x3x256xf32, #tpu.memory_space<vmem>>, vector<1x3x256xf32>,
    return
  }
  func.func @transform_0(%arg0: i32, %arg1: i32) -> (i32, i32, i32) {
    %c0_i32 = arith.constant 0 : i32
    %c0_i32_0 = arith.constant 0 : i32
    return %arg0, %c0_i32, %arg1 : i32, i32, i32
  }
  func.func @transform_1(%arg0: i32, %arg1: i32) -> (i32, i32) {
    %c0_i32 = arith.constant 0 : i32
    %c0_i32_0 = arith.constant 0 : i32
    %c0_i32_1 = arith.constant 0 : i32
    return %c0_i32, %c0_i32_0 : i32, i32
  }
  func.func @transform_2(%arg0: i32, %arg1: i32) -> (i32, i32) {
    %c0_i32 = arith.constant 0 : i32
    %c0_i32_0 = arith.constant 0 : i32
    %c0_i32_1 = arith.constant 0 : i32
    return %c0_i32, %c0_i32_0 : i32, i32
  }
  func.func @transform_3(%arg0: i32, %arg1: i32) -> (i32, i32, i32) {
    %c0_i32 = arith.constant 0 : i32
    %c0_i32_0 = arith.constant 0 : i32
    return %arg0, %c0_i32, %arg1 : i32, i32, i32
  }
  func.func @transform_4(%arg0: i32, %arg1: i32) -> (i32, i32, i32) {
    %c0_i32 = arith.constant 0 : i32
    %c0_i32_0 = arith.constant 0 : i32
    return %arg0, %c0_i32, %arg1 : i32, i32, i32
  }
}

</mosaic_0001>

<llo_original>
// kernel: res_aspp2_forward.27
$region0: #{res_aspp2_forward.27}
  #allocation0 [shape = 'u32[]', space=smem, size = 0x4, offset = 0x4, fixed_abs, tag = 'smem constant byte address 0x4 - core index']
  #allocation1 [shape = 'u32[144,128]{1,0:T(1,128)}', space=vmem, size = 0x12000, scoped, tag = 'internal scratch']
  %s0 = inlined_call_operand.vmem [shape: f32[2,27,256], index: 0, kind: input, shape index: {}]
  %s1 = inlined_call_operand.vmem [shape: f32[3,27], index: 1, kind: input, shape index: {}]
  %s2 = inlined_call_operand.vmem [shape: f32[3,1], index: 2, kind: input, shape index: {}]
  %s3 = inlined_call_operand.vmem [shape: f32[2,3,256], index: 3, kind: output, shape index: {}]
  %s4 = sld [smem:[#allocation0]]
  $region45: #{res_aspp2_forward.27} parent=0
    _
  %s6 = ssub.s32 1, %s4
  %s7 = scalar_select 0, %s6, %s4
  loop: start=0, step=1, limit=4
  $region2: #{res_aspp2_forward.27} parent=0 // loop_pre_header
    _
  $region3: #{res_aspp2_forward.27} parent=0 // loop_header
    %s9 = sphi 0, %s13
    %p10 = scmp.ge.s32.totalorder %s9, 4
    %s16 = sphi 0, %s28
    %s17 = sphi 0, %s24
    %s18 = sphi 0, %s16
    %s19 = sphi 0, %s17
    %s20 = sphi 0, %s18
    %s21 = sphi 0, %s19
    %s33 = sphi 0, %s35
    %s36 = sphi 0, %s33
    %s37 = sphi 0, %s36
    %s53 = sphi 0, %s37
    %s57 = sphi 0, %s57
    %s59 = sphi 0, %s57
    %s60 = sphi 0, %s59
    %s74 = sphi 0, %s60
    %s78 = sphi 0, %s78
    %s80 = sphi 0, %s78
    %s81 = sphi 0, %s80
    %s95 = sphi 0, %s81
    %s103 = sphi 0, %s105
    %s106 = sphi 0, %s103
    %s107 = sphi 0, %s106
    %s123 = sphi 0, %s107
  $region4: #{res_aspp2_forward.27} parent=0 // loop_header_branch
    %12 = sbr.rel (%p10) target = $region8
  $region5: #{res_aspp2_forward.27} parent=0 // loop_body
    %s14 = ssub.s32 %s9, 1
    %s15 = ssub.s32 %s9, 2
    %s22 = sadd.s32 1, %s17
    %p23 = scmp.ge.s32.totalorder %s22, 1
    %s24 = scalar_select %p23, 0, %s22
    %s25 = sadd.s32 1, %s16
    %s26 = scalar_select %p23, %s25, %s16
    %p27 = scmp.ge.s32.totalorder %s26, 2
    %s28 = scalar_select %p27, 0, %s26
    %s29 = ssub.s32 %s16, %s28
    %s30 = ssub.s32 %s17, %s24
    %s31 = sor.u32 %s29, %s30
    %p32 = scmp.eq.s32.totalorder %s31, 0
    %s34 = sadd.s32 %s33, 1
    %s35 = scalar_select %p32, %s33, %s34
    %p38 = pneg %p32
    %p39 = scmp.eq.s32.totalorder %s9, 1
    %p40 = por %p38, %p39
    %p41 = scmp.ne.s32.totalorder %s33, %s36
    %p42 = scmp.eq.s32.totalorder %s9, 0
    %p43 = por %p41, %p42
    %p44 = scmp.ne.s32.totalorder %s33, %s36
    %p45 = scmp.eq.s32.totalorder %s14, 1
    %p46 = por %p44, %p45
    %p47 = scmp.ne.s32.totalorder %s36, %s37
    %p48 = scmp.eq.s32.totalorder %s14, 0
    %p49 = por %p47, %p48
    %p50 = scmp.ne.s32.totalorder %s36, %s37
    %p51 = scmp.eq.s32.totalorder %s15, 1
    %p52 = por %p50, %p51
    %p54 = scmp.ne.s32.totalorder %s37, %s53
    %p55 = scmp.eq.s32.totalorder %s15, 0
    %p56 = por %p54, %p55
    %s58 = sadd.s32 %s57, 1
    %p61 = scmp.eq.s32.totalorder %s9, 1
    %p62 = scmp.ne.s32.totalorder %s57, %s59
    %p63 = scmp.eq.s32.totalorder %s9, 0
    %p64 = por %p62, %p63
    %p65 = scmp.ne.s32.totalorder %s57, %s59
    %p66 = scmp.eq.s32.totalorder %s14, 1
    %p67 = por %p65, %p66
    %p68 = scmp.ne.s32.totalorder %s59, %s60
    %p69 = scmp.eq.s32.totalorder %s14, 0
    %p70 = por %p68, %p69
    %p71 = scmp.ne.s32.totalorder %s59, %s60
    %p72 = scmp.eq.s32.totalorder %s15, 1
    %p73 = por %p71, %p72
    %p75 = scmp.ne.s32.totalorder %s60, %s74
    %p76 = scmp.eq.s32.totalorder %s15, 0
    %p77 = por %p75, %p76
    %s79 = sadd.s32 %s78, 1
    %p82 = scmp.eq.s32.totalorder %s9, 1
    %p83 = scmp.ne.s32.totalorder %s78, %s80
    %p84 = scmp.eq.s32.totalorder %s9, 0
    %p85 = por %p83, %p84
    %p86 = scmp.ne.s32.totalorder %s78, %s80
    %p87 = scmp.eq.s32.totalorder %s14, 1
    %p88 = por %p86, %p87
    %p89 = scmp.ne.s32.totalorder %s80, %s81
    %p90 = scmp.eq.s32.totalorder %s14, 0
    %p91 = por %p89, %p90
    %p92 = scmp.ne.s32.totalorder %s80, %s81
    %p93 = scmp.eq.s32.totalorder %s15, 1
    %p94 = por %p92, %p93
    %p96 = scmp.ne.s32.totalorder %s81, %s95
    %p97 = scmp.eq.s32.totalorder %s15, 0
    %p98 = por %p96, %p97
    %s99 = ssub.s32 %s16, %s28
    %s100 = ssub.s32 %s17, %s24
    %s101 = sor.u32 %s99, %s100
    %p102 = scmp.eq.s32.totalorder %s101, 0
    %s104 = sadd.s32 %s103, 1
    %s105 = scalar_select %p102, %s103, %s104
    %p108 = pneg %p102
    %p109 = scmp.eq.s32.totalorder %s9, 1
    %p110 = por %p108, %p109
    %p111 = scmp.ne.s32.totalorder %s103, %s106
    %p112 = scmp.eq.s32.totalorder %s9, 0
    %p113 = por %p111, %p112
    %p114 = scmp.ne.s32.totalorder %s103, %s106
    %p115 = scmp.eq.s32.totalorder %s14, 1
    %p116 = por %p114, %p115
    %p117 = scmp.ne.s32.totalorder %s106, %s107
    %p118 = scmp.eq.s32.totalorder %s14, 0
    %p119 = por %p117, %p118
    %p120 = scmp.ne.s32.totalorder %s106, %s107
    %p121 = scmp.eq.s32.totalorder %s15, 1
    %p122 = por %p120, %p121
    %p124 = scmp.ne.s32.totalorder %s107, %s123
    %p125 = scmp.eq.s32.totalorder %s15, 0
    %p126 = por %p124, %p125
    %p127 = scmp.le.s32.totalorder 1, %s9
    %p128 = scmp.lt.s32.totalorder %s9, 3
    %p129 = pnand %p127, %p128
    %p130 = pneg %p129
    // Predicated region
    $region9: #{res_aspp2_forward.27} parent=5 // pred_check
      _
    $region10: #{res_aspp2_forward.27} parent=5 // pred_check_branch
      %132 = sbr.rel (%p129) target = $region12
    $region11: #{res_aspp2_forward.27} parent=5 // pred_region
      %s133 = ssub.s32 %s9, 1
      // Predicated region
      $region13: #{res_aspp2_forward.27} parent=11 // pred_check
        %p134 = pneg %p70
      $region14: #{res_aspp2_forward.27} parent=11 // pred_check_branch
        %136 = sbr.rel (%p134) target = $region16
      $region15: #{res_aspp2_forward.27} parent=11 // pred_region
        _
      $region16: #{res_aspp2_forward.27} parent=11 // pred_fallthru
        _
      // Predicated region
      $region17: #{res_aspp2_forward.27} parent=11 // pred_check
        %p137 = pneg %p91
      $region18: #{res_aspp2_forward.27} parent=11 // pred_check_branch
        %139 = sbr.rel (%p137) target = $region20
      $region19: #{res_aspp2_forward.27} parent=11 // pred_region
        _
      $region20: #{res_aspp2_forward.27} parent=11 // pred_fallthru
        _
    $region12: #{res_aspp2_forward.27} parent=5 // pred_fallthru
      _
    %p140 = scmp.lt.s32.totalorder %s9, 2
    // Predicated region
    $region21: #{res_aspp2_forward.27} parent=5 // pred_check
      %p141 = pneg %p140
    $region22: #{res_aspp2_forward.27} parent=5 // pred_check_branch
      %143 = sbr.rel (%p141) target = $region24
    $region23: #{res_aspp2_forward.27} parent=5 // pred_region
      // Predicated region
      $region25: #{res_aspp2_forward.27} parent=23 // pred_check
        %p144 = pneg %p43
      $region26: #{res_aspp2_forward.27} parent=23 // pred_check_branch
        %146 = sbr.rel (%p144) target = $region28
      $region27: #{res_aspp2_forward.27} parent=23 // pred_region
        %s147 = smul.u32 2, %s17
        %p148 = scmp.lt.s32.totalorder %s16, 1
        %s149 = scalar_select %p148, %s16, 1
        %p150 = scmp.lt.s32.totalorder %s147, 1
        %s151 = scalar_select %p150, %s147, 1
        %s152 = smul.addr %s149, 8
        %s153 = sadd.s32 %s151, %s152
        %s154 = smul.addr %s153, 8
        %s155 = scalar_lea.vmem %s0, %s154
        %s156 = smul.u32 2, %s17
      $region28: #{res_aspp2_forward.27} parent=23 // pred_fallthru
        _
    $region24: #{res_aspp2_forward.27} parent=5 // pred_fallthru
      _
    %p157 = scmp.le.s32.totalorder 1, %s9
    %p158 = scmp.lt.s32.totalorder %s9, 3
    %p159 = pnand %p157, %p158
    %p160 = pneg %p159
    // Predicated region
    $region29: #{res_aspp2_forward.27} parent=5 // pred_check
      _
    $region30: #{res_aspp2_forward.27} parent=5 // pred_check_branch
      %162 = sbr.rel (%p159) target = $region32
    $region31: #{res_aspp2_forward.27} parent=5 // pred_region
      %s163 = ssub.s32 %s9, 1
      %s164 = smul.u32 2, %s19
      %p165 = scmp.lt.s32.totalorder %s18, 1
      %s166 = scalar_select %p165, %s18, 1
      %p167 = scmp.lt.s32.totalorder %s164, 1
      %s168 = scalar_select %p167, %s164, 1
      %s169 = smul.addr %s166, 8
      %s170 = sadd.s32 %s168, %s169
      %s171 = smul.addr %s170, 8
      %s172 = scalar_lea.vmem %s0, %s171
      %p173 = pneg %p49
      %p174 = pneg %p46
      %p175 = pneg %p70
      %p176 = pneg %p67
      %p177 = pneg %p91
      %p178 = pneg %p88
      %p179 = pneg %p119
      %p180 = pneg %p116
      %s181 = smul.u32 2, %s19
      %p182 = scmp.lt.s32.totalorder %s18, 1
      %s183 = scalar_select %p182, %s18, 1
      %p184 = scmp.lt.s32.totalorder %s181, 1
      %s185 = scalar_select %p184, %s181, 1
      %s186 = smul.addr %s183, 2
      %s187 = sadd.s32 %s185, %s186
      %s188 = smul.addr %s187, 4
      %s189 = scalar_lea.vmem %s3, %s188
      %s190 = smul.u32 2, %s19
      %p191 = scmp.lt.s32.totalorder %s18, 1
      %s192 = scalar_select %p191, %s18, 1
      %p193 = scmp.lt.s32.totalorder %s190, 1
      %s194 = scalar_select %p193, %s190, 1
      %s195 = smul.addr %s192, 8
      %s196 = sadd.s32 %s194, %s195
      %s197 = smul.addr %s196, 8
      %s198 = scalar_lea.vmem %s0, %s197
      %s199 = smul.u32 2, %s19
      %s200 = smul.u32 2, %s19
      %p201 = scmp.lt.s32.totalorder %s18, 1
      %s202 = scalar_select %p201, %s18, 1
      %p203 = scmp.lt.s32.totalorder %s200, 1
      %s204 = scalar_select %p203, %s200, 1
      %s205 = smul.addr %s202, 2
      %s206 = sadd.s32 %s204, %s205
      %s207 = smul.addr %s206, 4
      %s208 = scalar_lea.vmem %s3, %s207
      %s209 = smul.u32 2, %s19
      %v210 = vld [vmem:[%s1] sm:$0x7]
      %v211 = vld [vmem:[%s198] sm:$0xff]
      %v212 = vld [vmem:[%s198 + $0x8] sm:$0xff]
      %v213 = vld [vmem:[%s198 + $0x10] sm:$0xff]
      %v214 = vld [vmem:[%s198 + $0x18] sm:$0xff]
      %v215 = vld [vmem:[%s198 + $0x20] sm:$0xff]
      %v216 = vld [vmem:[%s198 + $0x28] sm:$0xff]
      %v217 = vld [vmem:[%s198 + $0x30] sm:$0x7]
      %v218 = vld [vmem:[%s198 + $0x38] sm:$0x7]
      %v219 = vld [vmem:[%s2] sm:$0x7]
      %221 = vset.pattern.permute.xlu0 0
      %222 = vperm.xlu0 %221, %v219
      %v223 = vpop.permute.xlu0 %222
      %vm225 = vcmask 220160
      %v227 = vsel %vm225, %v210, 0
      %vm229 = vcmask 1042432
      %v231 = vsel %vm229, %v217, 0
      %v234 = vsel %vm229, %v218, 0
      %236 = vmatprep.subr.mxu0 0.0
      %237 = vmatpush1.msra.mxu0 0.0
      %238 = vmatprep.subr.mxu0 0.0
      %239 = vmatpush1.msra.mxu0 0.0
      %240 = vmatprep.subr.mxu0 0.0
      %241 = vmatpush1.msra.mxu0 0.0
      %242 = vmatprep.subr.mxu0 0.0
      %243 = vmatpush1.msra.mxu0 0.0
      %244 = vmatprep.subr.mxu0 0.0
      %245 = vmatpush1.msra.mxu0 0.0
      %246 = vmatprep.subr.mxu0 0.0
      %247 = vmatpush1.msra.mxu0 0.0
      %248 = vmatprep.subr.mxu0 0.0
      %249 = vmatpush1.msra.mxu0 0.0
      %250 = vmatprep.subr.mxu0 0.0
      %251 = vmatpush1.msra.mxu0 0.0
      %252 = vmatprep.subr.mxu0 0.0
      %253 = vmatpush1.msra.mxu0 0.0
      %254 = vmatprep.subr.mxu0 0.0
      %255 = vmatpush1.msra.mxu0 0.0
      %256 = vmatprep.subr.mxu0 0.0
      %257 = vmatpush1.msra.mxu0 0.0
      %258 = vmatprep.subr.mxu0 0.0
      %259 = vmatpush1.msra.mxu0 0.0
      %260 = vmatprep.subr.mxu0 %v234
      %261 = vmatpush1.msra.mxu0 %v231
      %262 = vmatprep.subr.mxu0 %v216
      %263 = vmatpush1.msra.mxu0 %v215
      %264 = vmatprep.subr.mxu0 %v214
      %265 = vmatpush1.msra.mxu0 %v213
      %266 = vmatprep.subr.mxu0 %v212
      %267 = vmatpush1.msra.mxu0 %v211
      %268 = vmatprep.subr.mxu0 0.0
      %269 = vmatpush2.msra.mxu0 0.0
      %270 = vmatprep.subr.mxu0 0.0
      %271 = vmatpush2.msra.mxu0 0.0
      %272 = vmatprep.subr.mxu0 0.0
      %273 = vmatpush2.msra.mxu0 0.0
      %274 = vmatprep.subr.mxu0 0.0
      %275 = vmatpush2.msra.mxu0 0.0
      %276 = vmatprep.subr.mxu0 0.0
      %277 = vmatpush2.msra.mxu0 0.0
      %278 = vmatprep.subr.mxu0 0.0
      %279 = vmatpush2.msra.mxu0 0.0
      %280 = vmatprep.subr.mxu0 0.0
      %281 = vmatpush2.msra.mxu0 0.0
      %282 = vmatprep.subr.mxu0 0.0
      %283 = vmatpush2.msra.mxu0 0.0
      %284 = vmatprep.subr.mxu0 0.0
      %285 = vmatpush2.msra.mxu0 0.0
      %286 = vmatprep.subr.mxu0 0.0
      %287 = vmatpush2.msra.mxu0 0.0
      %288 = vmatprep.subr.mxu0 0.0
      %289 = vmatpush2.msra.mxu0 0.0
      %290 = vmatprep.subr.mxu0 0.0
      %291 = vmatpush2.msra.mxu0 0.0
      %292 = vmatprep.subr.mxu0 0.0
      %293 = vmatpush2.msra.mxu0 0.0
      %294 = vmatprep.subr.mxu0 0.0
      %295 = vmatpush2.msra.mxu0 0.0
      %296 = vmatprep.subr.mxu0 0.0
      %297 = vmatpush2.msra.mxu0 0.0
      %298 = vmatprep.subr.mxu0 0.0
      %299 = vmatpush2.msra.mxu0 0.0
      %300 = vmatprep.mubr.f32.mxu0 0.0
      %301 = vmatmul.mubr.f32.gmra.mxu0 %v227
      %v302 = vpop.f32.mrf.mxu0
      %v303 = vadd.f32 %v223, %v302
      %v304 = vpop.f32.mrf.mxu0
      %v305 = vadd.f32 %v223, %v304
      %306 = vdwg.mxu0
      %v307 = vmax.f32 %v303, 0.0
      %v308 = vmax.f32 %v305, 0.0
      %v311 = vcombine.low %v307, %v308
      %313 = vst [vmem:[%s208] sm:$0x77] %v311
      %s314 = smul.u32 2, %s19
      %p315 = scmp.lt.s32.totalorder %s18, 1
      %s316 = scalar_select %p315, %s18, 1
      %p317 = scmp.lt.s32.totalorder %s314, 1
      %s318 = scalar_select %p317, %s314, 1
      %s319 = smul.addr %s316, 2
      %s320 = sadd.s32 %s318, %s319
      %s321 = smul.addr %s320, 4
      %s322 = scalar_lea.vmem %s3, %s321
      // Predicated region
      $region33: #{res_aspp2_forward.27} parent=31 // pred_check
        %p323 = pneg %p116
      $region34: #{res_aspp2_forward.27} parent=31 // pred_check_branch
        %325 = sbr.rel (%p323) target = $region36
      $region35: #{res_aspp2_forward.27} parent=31 // pred_region
        %s326 = smul.u32 2, %s19
      $region36: #{res_aspp2_forward.27} parent=31 // pred_fallthru
        _
    $region32: #{res_aspp2_forward.27} parent=5 // pred_fallthru
      _
    %p327 = scmp.le.s32.totalorder 2, %s9
    // Predicated region
    $region37: #{res_aspp2_forward.27} parent=5 // pred_check
      %p328 = pneg %p327
    $region38: #{res_aspp2_forward.27} parent=5 // pred_check_branch
      %330 = sbr.rel (%p328) target = $region40
    $region39: #{res_aspp2_forward.27} parent=5 // pred_region
      %s331 = ssub.s32 %s9, 2
      // Predicated region
      $region41: #{res_aspp2_forward.27} parent=39 // pred_check
        %p332 = pneg %p122
      $region42: #{res_aspp2_forward.27} parent=39 // pred_check_branch
        %334 = sbr.rel (%p332) target = $region44
      $region43: #{res_aspp2_forward.27} parent=39 // pred_region
        %s335 = smul.u32 2, %s21
        %p336 = scmp.lt.s32.totalorder %s20, 1
        %s337 = scalar_select %p336, %s20, 1
        %p338 = scmp.lt.s32.totalorder %s335, 1
        %s339 = scalar_select %p338, %s335, 1
        %s340 = smul.addr %s337, 2
        %s341 = sadd.s32 %s339, %s340
        %s342 = smul.addr %s341, 4
        %s343 = scalar_lea.vmem %s3, %s342
      $region44: #{res_aspp2_forward.27} parent=39 // pred_fallthru
        _
    $region40: #{res_aspp2_forward.27} parent=5 // pred_fallthru
      _
  $region6: #{res_aspp2_forward.27} parent=0 // loop_footer
    %s13 = sadd.s32 1, %s9
  $region7: #{res_aspp2_forward.27} parent=0 // loop_footer_branch
    %8 = sbr.rel target = $region3
  $region8: #{res_aspp2_forward.27} parent=0 // loop_exit
    _

// kernel: res_aspp2_forward.28
$region0: #{res_aspp2_forward.28}
  #allocation0 [shape = 'u32[]', space=smem, size = 0x4, offset = 0x4, fixed_abs, tag = 'smem constant byte address 0x4 - core index']
  #allocation1 [shape = 'u32[144,128]{1,0:T(1,128)}', space=vmem, size = 0x12000, scoped, tag = 'internal scratch']
  %s0 = inlined_call_operand.vmem [shape: f32[2,27,256], index: 0, kind: input, shape index: {}]
  %s1 = inlined_call_operand.vmem [shape: f32[16,27], index: 1, kind: input, shape index: {}]
  %s2 = inlined_call_operand.vmem [shape: f32[16,1], index: 2, kind: input, shape index: {}]
  %s3 = inlined_call_operand.vmem [shape: f32[2,16,256], index: 3, kind: output, shape index: {}]
  %s4 = sld [smem:[#allocation0]]
  $region45: #{res_aspp2_forward.28} parent=0
    _
  %s6 = ssub.s32 1, %s4
  %s7 = scalar_select 0, %s6, %s4
  loop: start=0, step=1, limit=4
  $region2: #{res_aspp2_forward.28} parent=0 // loop_pre_header
    _
  $region3: #{res_aspp2_forward.28} parent=0 // loop_header
    %s9 = sphi 0, %s13
    %p10 = scmp.ge.s32.totalorder %s9, 4
    %s16 = sphi 0, %s28
    %s17 = sphi 0, %s24
    %s18 = sphi 0, %s16
    %s19 = sphi 0, %s17
    %s20 = sphi 0, %s18
    %s21 = sphi 0, %s19
    %s33 = sphi 0, %s35
    %s36 = sphi 0, %s33
    %s37 = sphi 0, %s36
    %s53 = sphi 0, %s37
    %s57 = sphi 0, %s57
    %s59 = sphi 0, %s57
    %s60 = sphi 0, %s59
    %s74 = sphi 0, %s60
    %s78 = sphi 0, %s78
    %s80 = sphi 0, %s78
    %s81 = sphi 0, %s80
    %s95 = sphi 0, %s81
    %s103 = sphi 0, %s105
    %s106 = sphi 0, %s103
    %s107 = sphi 0, %s106
    %s123 = sphi 0, %s107
  $region4: #{res_aspp2_forward.28} parent=0 // loop_header_branch
    %12 = sbr.rel (%p10) target = $region8
  $region5: #{res_aspp2_forward.28} parent=0 // loop_body
    %s14 = ssub.s32 %s9, 1
    %s15 = ssub.s32 %s9, 2
    %s22 = sadd.s32 1, %s17
    %p23 = scmp.ge.s32.totalorder %s22, 1
    %s24 = scalar_select %p23, 0, %s22
    %s25 = sadd.s32 1, %s16
    %s26 = scalar_select %p23, %s25, %s16
    %p27 = scmp.ge.s32.totalorder %s26, 2
    %s28 = scalar_select %p27, 0, %s26
    %s29 = ssub.s32 %s16, %s28
    %s30 = ssub.s32 %s17, %s24
    %s31 = sor.u32 %s29, %s30
    %p32 = scmp.eq.s32.totalorder %s31, 0
    %s34 = sadd.s32 %s33, 1
    %s35 = scalar_select %p32, %s33, %s34
    %p38 = pneg %p32
    %p39 = scmp.eq.s32.totalorder %s9, 1
    %p40 = por %p38, %p39
    %p41 = scmp.ne.s32.totalorder %s33, %s36
    %p42 = scmp.eq.s32.totalorder %s9, 0
    %p43 = por %p41, %p42
    %p44 = scmp.ne.s32.totalorder %s33, %s36
    %p45 = scmp.eq.s32.totalorder %s14, 1
    %p46 = por %p44, %p45
    %p47 = scmp.ne.s32.totalorder %s36, %s37
    %p48 = scmp.eq.s32.totalorder %s14, 0
    %p49 = por %p47, %p48
    %p50 = scmp.ne.s32.totalorder %s36, %s37
    %p51 = scmp.eq.s32.totalorder %s15, 1
    %p52 = por %p50, %p51
    %p54 = scmp.ne.s32.totalorder %s37, %s53
    %p55 = scmp.eq.s32.totalorder %s15, 0
    %p56 = por %p54, %p55
    %s58 = sadd.s32 %s57, 1
    %p61 = scmp.eq.s32.totalorder %s9, 1
    %p62 = scmp.ne.s32.totalorder %s57, %s59
    %p63 = scmp.eq.s32.totalorder %s9, 0
    %p64 = por %p62, %p63
    %p65 = scmp.ne.s32.totalorder %s57, %s59
    %p66 = scmp.eq.s32.totalorder %s14, 1
    %p67 = por %p65, %p66
    %p68 = scmp.ne.s32.totalorder %s59, %s60
    %p69 = scmp.eq.s32.totalorder %s14, 0
    %p70 = por %p68, %p69
    %p71 = scmp.ne.s32.totalorder %s59, %s60
    %p72 = scmp.eq.s32.totalorder %s15, 1
    %p73 = por %p71, %p72
    %p75 = scmp.ne.s32.totalorder %s60, %s74
    %p76 = scmp.eq.s32.totalorder %s15, 0
    %p77 = por %p75, %p76
    %s79 = sadd.s32 %s78, 1
    %p82 = scmp.eq.s32.totalorder %s9, 1
    %p83 = scmp.ne.s32.totalorder %s78, %s80
    %p84 = scmp.eq.s32.totalorder %s9, 0
    %p85 = por %p83, %p84
    %p86 = scmp.ne.s32.totalorder %s78, %s80
    %p87 = scmp.eq.s32.totalorder %s14, 1
    %p88 = por %p86, %p87
    %p89 = scmp.ne.s32.totalorder %s80, %s81
    %p90 = scmp.eq.s32.totalorder %s14, 0
    %p91 = por %p89, %p90
    %p92 = scmp.ne.s32.totalorder %s80, %s81
    %p93 = scmp.eq.s32.totalorder %s15, 1
    %p94 = por %p92, %p93
    %p96 = scmp.ne.s32.totalorder %s81, %s95
    %p97 = scmp.eq.s32.totalorder %s15, 0
    %p98 = por %p96, %p97
    %s99 = ssub.s32 %s16, %s28
    %s100 = ssub.s32 %s17, %s24
    %s101 = sor.u32 %s99, %s100
    %p102 = scmp.eq.s32.totalorder %s101, 0
    %s104 = sadd.s32 %s103, 1
    %s105 = scalar_select %p102, %s103, %s104
    %p108 = pneg %p102
    %p109 = scmp.eq.s32.totalorder %s9, 1
    %p110 = por %p108, %p109
    %p111 = scmp.ne.s32.totalorder %s103, %s106
    %p112 = scmp.eq.s32.totalorder %s9, 0
    %p113 = por %p111, %p112
    %p114 = scmp.ne.s32.totalorder %s103, %s106
    %p115 = scmp.eq.s32.totalorder %s14, 1
    %p116 = por %p114, %p115
    %p117 = scmp.ne.s32.totalorder %s106, %s107
    %p118 = scmp.eq.s32.totalorder %s14, 0
    %p119 = por %p117, %p118
    %p120 = scmp.ne.s32.totalorder %s106, %s107
    %p121 = scmp.eq.s32.totalorder %s15, 1
    %p122 = por %p120, %p121
    %p124 = scmp.ne.s32.totalorder %s107, %s123
    %p125 = scmp.eq.s32.totalorder %s15, 0
    %p126 = por %p124, %p125
    %p127 = scmp.le.s32.totalorder 1, %s9
    %p128 = scmp.lt.s32.totalorder %s9, 3
    %p129 = pnand %p127, %p128
    %p130 = pneg %p129
    // Predicated region
    $region9: #{res_aspp2_forward.28} parent=5 // pred_check
      _
    $region10: #{res_aspp2_forward.28} parent=5 // pred_check_branch
      %132 = sbr.rel (%p129) target = $region12
    $region11: #{res_aspp2_forward.28} parent=5 // pred_region
      %s133 = ssub.s32 %s9, 1
      // Predicated region
      $region13: #{res_aspp2_forward.28} parent=11 // pred_check
        %p134 = pneg %p70
      $region14: #{res_aspp2_forward.28} parent=11 // pred_check_branch
        %136 = sbr.rel (%p134) target = $region16
      $region15: #{res_aspp2_forward.28} parent=11 // pred_region
        _
      $region16: #{res_aspp2_forward.28} parent=11 // pred_fallthru
        _
      // Predicated region
      $region17: #{res_aspp2_forward.28} parent=11 // pred_check
        %p137 = pneg %p91
      $region18: #{res_aspp2_forward.28} parent=11 // pred_check_branch
        %139 = sbr.rel (%p137) target = $region20
      $region19: #{res_aspp2_forward.28} parent=11 // pred_region
        _
      $region20: #{res_aspp2_forward.28} parent=11 // pred_fallthru
        _
    $region12: #{res_aspp2_forward.28} parent=5 // pred_fallthru
      _
    %p140 = scmp.lt.s32.totalorder %s9, 2
    // Predicated region
    $region21: #{res_aspp2_forward.28} parent=5 // pred_check
      %p141 = pneg %p140
    $region22: #{res_aspp2_forward.28} parent=5 // pred_check_branch
      %143 = sbr.rel (%p141) target = $region24
    $region23: #{res_aspp2_forward.28} parent=5 // pred_region
      // Predicated region
      $region25: #{res_aspp2_forward.28} parent=23 // pred_check
        %p144 = pneg %p43
      $region26: #{res_aspp2_forward.28} parent=23 // pred_check_branch
        %146 = sbr.rel (%p144) target = $region28
      $region27: #{res_aspp2_forward.28} parent=23 // pred_region
        %s147 = smul.u32 2, %s17
        %p148 = scmp.lt.s32.totalorder %s16, 1
        %s149 = scalar_select %p148, %s16, 1
        %p150 = scmp.lt.s32.totalorder %s147, 1
        %s151 = scalar_select %p150, %s147, 1
        %s152 = smul.addr %s149, 8
        %s153 = sadd.s32 %s151, %s152
        %s154 = smul.addr %s153, 8
        %s155 = scalar_lea.vmem %s0, %s154
        %s156 = smul.u32 2, %s17
      $region28: #{res_aspp2_forward.28} parent=23 // pred_fallthru
        _
    $region24: #{res_aspp2_forward.28} parent=5 // pred_fallthru
      _
    %p157 = scmp.le.s32.totalorder 1, %s9
    %p158 = scmp.lt.s32.totalorder %s9, 3
    %p159 = pnand %p157, %p158
    %p160 = pneg %p159
    // Predicated region
    $region29: #{res_aspp2_forward.28} parent=5 // pred_check
      _
    $region30: #{res_aspp2_forward.28} parent=5 // pred_check_branch
      %162 = sbr.rel (%p159) target = $region32
    $region31: #{res_aspp2_forward.28} parent=5 // pred_region
      %s163 = ssub.s32 %s9, 1
      %s164 = smul.u32 2, %s19
      %p165 = scmp.lt.s32.totalorder %s18, 1
      %s166 = scalar_select %p165, %s18, 1
      %p167 = scmp.lt.s32.totalorder %s164, 1
      %s168 = scalar_select %p167, %s164, 1
      %s169 = smul.addr %s166, 8
      %s170 = sadd.s32 %s168, %s169
      %s171 = smul.addr %s170, 8
      %s172 = scalar_lea.vmem %s0, %s171
      %p173 = pneg %p49
      %p174 = pneg %p46
      %p175 = pneg %p70
      %p176 = pneg %p67
      %p177 = pneg %p91
      %p178 = pneg %p88
      %p179 = pneg %p119
      %p180 = pneg %p116
      %s181 = smul.u32 2, %s19
      %p182 = scmp.lt.s32.totalorder %s18, 1
      %s183 = scalar_select %p182, %s18, 1
      %p184 = scmp.lt.s32.totalorder %s181, 1
      %s185 = scalar_select %p184, %s181, 1
      %s186 = smul.addr %s183, 4
      %s187 = sadd.s32 %s185, %s186
      %s188 = smul.addr %s187, 8
      %s189 = scalar_lea.vmem %s3, %s188
      %s190 = smul.u32 2, %s19
      %p191 = scmp.lt.s32.totalorder %s18, 1
      %s192 = scalar_select %p191, %s18, 1
      %p193 = scmp.lt.s32.totalorder %s190, 1
      %s194 = scalar_select %p193, %s190, 1
      %s195 = smul.addr %s192, 8
      %s196 = sadd.s32 %s194, %s195
      %s197 = smul.addr %s196, 8
      %s198 = scalar_lea.vmem %s0, %s197
      %s199 = smul.u32 2, %s19
      %s200 = smul.u32 2, %s19
      %p201 = scmp.lt.s32.totalorder %s18, 1
      %s202 = scalar_select %p201, %s18, 1
      %p203 = scmp.lt.s32.totalorder %s200, 1
      %s204 = scalar_select %p203, %s200, 1
      %s205 = smul.addr %s202, 4
      %s206 = sadd.s32 %s204, %s205
      %s207 = smul.addr %s206, 8
      %s208 = scalar_lea.vmem %s3, %s207
      %s209 = smul.u32 2, %s19
      %v210 = vld [vmem:[%s1] sm:$0xff]
      %v211 = vld [vmem:[%s1 + $0x8] sm:$0xff]
      %v212 = vld [vmem:[%s198] sm:$0xff]
      %v213 = vld [vmem:[%s198 + $0x8] sm:$0xff]
      %v214 = vld [vmem:[%s198 + $0x10] sm:$0xff]
      %v215 = vld [vmem:[%s198 + $0x18] sm:$0xff]
      %v216 = vld [vmem:[%s198 + $0x20] sm:$0xff]
      %v217 = vld [vmem:[%s198 + $0x28] sm:$0xff]
      %v218 = vld [vmem:[%s198 + $0x30] sm:$0x7]
      %v219 = vld [vmem:[%s198 + $0x38] sm:$0x7]
      %v220 = vld [vmem:[%s2] sm:$0xff]
      %v221 = vld [vmem:[%s2 + $0x8] sm:$0xff]
      %223 = vset.pattern.permute.xlu0 0
      %224 = vperm.xlu0 %223, %v220
      %v225 = vpop.permute.xlu0 %224
      %228 = vset.pattern.permute.xlu0 0
      %229 = vperm.xlu0 %228, %v221
      %v230 = vpop.permute.xlu0 %229
      %vm232 = vcmask 220160
      %v234 = vsel %vm232, %v210, 0
      %v237 = vsel %vm232, %v211, 0
      %vm239 = vcmask 1042432
      %v241 = vsel %vm239, %v218, 0
      %v244 = vsel %vm239, %v219, 0
      %246 = vmatprep.subr.mxu0 0.0
      %247 = vmatpush1.msra.mxu0 0.0
      %248 = vmatprep.subr.mxu0 0.0
      %249 = vmatpush1.msra.mxu0 0.0
      %250 = vmatprep.subr.mxu0 0.0
      %251 = vmatpush1.msra.mxu0 0.0
      %252 = vmatprep.subr.mxu0 0.0
      %253 = vmatpush1.msra.mxu0 0.0
      %254 = vmatprep.subr.mxu0 0.0
      %255 = vmatpush1.msra.mxu0 0.0
      %256 = vmatprep.subr.mxu0 0.0
      %257 = vmatpush1.msra.mxu0 0.0
      %258 = vmatprep.subr.mxu0 0.0
      %259 = vmatpush1.msra.mxu0 0.0
      %260 = vmatprep.subr.mxu0 0.0
      %261 = vmatpush1.msra.mxu0 0.0
      %262 = vmatprep.subr.mxu0 0.0
      %263 = vmatpush1.msra.mxu0 0.0
      %264 = vmatprep.subr.mxu0 0.0
      %265 = vmatpush1.msra.mxu0 0.0
      %266 = vmatprep.subr.mxu0 0.0
      %267 = vmatpush1.msra.mxu0 0.0
      %268 = vmatprep.subr.mxu0 0.0
      %269 = vmatpush1.msra.mxu0 0.0
      %270 = vmatprep.subr.mxu0 %v244
      %271 = vmatpush1.msra.mxu0 %v241
      %272 = vmatprep.subr.mxu0 %v217
      %273 = vmatpush1.msra.mxu0 %v216
      %274 = vmatprep.subr.mxu0 %v215
      %275 = vmatpush1.msra.mxu0 %v214
      %276 = vmatprep.subr.mxu0 %v213
      %277 = vmatpush1.msra.mxu0 %v212
      %278 = vmatprep.subr.mxu0 0.0
      %279 = vmatpush2.msra.mxu0 0.0
      %280 = vmatprep.subr.mxu0 0.0
      %281 = vmatpush2.msra.mxu0 0.0
      %282 = vmatprep.subr.mxu0 0.0
      %283 = vmatpush2.msra.mxu0 0.0
      %284 = vmatprep.subr.mxu0 0.0
      %285 = vmatpush2.msra.mxu0 0.0
      %286 = vmatprep.subr.mxu0 0.0
      %287 = vmatpush2.msra.mxu0 0.0
      %288 = vmatprep.subr.mxu0 0.0
      %289 = vmatpush2.msra.mxu0 0.0
      %290 = vmatprep.subr.mxu0 0.0
      %291 = vmatpush2.msra.mxu0 0.0
      %292 = vmatprep.subr.mxu0 0.0
      %293 = vmatpush2.msra.mxu0 0.0
      %294 = vmatprep.subr.mxu0 0.0
      %295 = vmatpush2.msra.mxu0 0.0
      %296 = vmatprep.subr.mxu0 0.0
      %297 = vmatpush2.msra.mxu0 0.0
      %298 = vmatprep.subr.mxu0 0.0
      %299 = vmatpush2.msra.mxu0 0.0
      %300 = vmatprep.subr.mxu0 0.0
      %301 = vmatpush2.msra.mxu0 0.0
      %302 = vmatprep.subr.mxu0 0.0
      %303 = vmatpush2.msra.mxu0 0.0
      %304 = vmatprep.subr.mxu0 0.0
      %305 = vmatpush2.msra.mxu0 0.0
      %306 = vmatprep.subr.mxu0 0.0
      %307 = vmatpush2.msra.mxu0 0.0
      %308 = vmatprep.subr.mxu0 0.0
      %309 = vmatpush2.msra.mxu0 0.0
      %310 = vmatprep.mubr.f32.mxu0 0.0
      %311 = vmatmul.mubr.f32.gmra.mxu0 %v234
      %v312 = vpop.f32.mrf.mxu0
      %v313 = vadd.f32 %v225, %v312
      %v314 = vpop.f32.mrf.mxu0
      %v315 = vadd.f32 %v225, %v314
      %316 = vmatprep.mubr.f32.mxu0 0.0
      %317 = vmatmul.mubr.f32.gmra.mxu0 %v237
      %v318 = vpop.f32.mrf.mxu0
      %v319 = vadd.f32 %v230, %v318
      %v320 = vpop.f32.mrf.mxu0
      %v321 = vadd.f32 %v230, %v320
      %322 = vdwg.mxu0
      %v323 = vmax.f32 %v313, 0.0
      %v324 = vmax.f32 %v315, 0.0
      %v325 = vmax.f32 %v319, 0.0
      %v326 = vmax.f32 %v321, 0.0
      %327 = vst [vmem:[%s208] sm:$0xff] %v323
      %328 = vst [vmem:[%s208 + $0x8] sm:$0xff] %v324
      %329 = vst [vmem:[%s208 + $0x10] sm:$0xff] %v325
      %330 = vst [vmem:[%s208 + $0x18] sm:$0xff] %v326
      %s331 = smul.u32 2, %s19
      %p332 = scmp.lt.s32.totalorder %s18, 1
      %s333 = scalar_select %p332, %s18, 1
      %p334 = scmp.lt.s32.totalorder %s331, 1
      %s335 = scalar_select %p334, %s331, 1
      %s336 = smul.addr %s333, 4
      %s337 = sadd.s32 %s335, %s336
      %s338 = smul.addr %s337, 8
      %s339 = scalar_lea.vmem %s3, %s338
      // Predicated region
      $region33: #{res_aspp2_forward.28} parent=31 // pred_check
        %p340 = pneg %p116
      $region34: #{res_aspp2_forward.28} parent=31 // pred_check_branch
        %342 = sbr.rel (%p340) target = $region36
      $region35: #{res_aspp2_forward.28} parent=31 // pred_region
        %s343 = smul.u32 2, %s19
      $region36: #{res_aspp2_forward.28} parent=31 // pred_fallthru
        _
    $region32: #{res_aspp2_forward.28} parent=5 // pred_fallthru
      _
    %p344 = scmp.le.s32.totalorder 2, %s9
    // Predicated region
    $region37: #{res_aspp2_forward.28} parent=5 // pred_check
      %p345 = pneg %p344
    $region38: #{res_aspp2_forward.28} parent=5 // pred_check_branch
      %347 = sbr.rel (%p345) target = $region40
    $region39: #{res_aspp2_forward.28} parent=5 // pred_region
      %s348 = ssub.s32 %s9, 2
      // Predicated region
      $region41: #{res_aspp2_forward.28} parent=39 // pred_check
        %p349 = pneg %p122
      $region42: #{res_aspp2_forward.28} parent=39 // pred_check_branch
        %351 = sbr.rel (%p349) target = $region44
      $region43: #{res_aspp2_forward.28} parent=39 // pred_region
        %s352 = smul.u32 2, %s21
        %p353 = scmp.lt.s32.totalorder %s20, 1
        %s354 = scalar_select %p353, %s20, 1
        %p355 = scmp.lt.s32.totalorder %s352, 1
        %s356 = scalar_select %p355, %s352, 1
        %s357 = smul.addr %s354, 4
        %s358 = sadd.s32 %s356, %s357
        %s359 = smul.addr %s358, 8
        %s360 = scalar_lea.vmem %s3, %s359
      $region44: #{res_aspp2_forward.28} parent=39 // pred_fallthru
        _
    $region40: #{res_aspp2_forward.28} parent=5 // pred_fallthru
      _
  $region6: #{res_aspp2_forward.28} parent=0 // loop_footer
    %s13 = sadd.s32 1, %s9
  $region7: #{res_aspp2_forward.28} parent=0 // loop_footer_branch
    %8 = sbr.rel target = $region3
  $region8: #{res_aspp2_forward.28} parent=0 // loop_exit
    _

// kernel: res_aspp2_forward.29
$region0: #{res_aspp2_forward.29}
  #allocation0 [shape = 'u32[]', space=smem, size = 0x4, offset = 0x4, fixed_abs, tag = 'smem constant byte address 0x4 - core index']
  #allocation1 [shape = 'u32[144,128]{1,0:T(1,128)}', space=vmem, size = 0x12000, scoped, tag = 'internal scratch']
  %s0 = inlined_call_operand.vmem [shape: f32[2,144,256], index: 0, kind: input, shape index: {}]
  %s1 = inlined_call_operand.vmem [shape: f32[4,144], index: 1, kind: input, shape index: {}]
  %s2 = inlined_call_operand.vmem [shape: f32[4,1], index: 2, kind: input, shape index: {}]
  %s3 = inlined_call_operand.vmem [shape: f32[2,4,256], index: 3, kind: output, shape index: {}]
  %s4 = sld [smem:[#allocation0]]
  $region45: #{res_aspp2_forward.29} parent=0
    _
  %s6 = ssub.s32 1, %s4
  %s7 = scalar_select 0, %s6, %s4
  loop: start=0, step=1, limit=4
  $region2: #{res_aspp2_forward.29} parent=0 // loop_pre_header
    _
  $region3: #{res_aspp2_forward.29} parent=0 // loop_header
    %s9 = sphi 0, %s13
    %p10 = scmp.ge.s32.totalorder %s9, 4
    %s16 = sphi 0, %s28
    %s17 = sphi 0, %s24
    %s18 = sphi 0, %s16
    %s19 = sphi 0, %s17
    %s20 = sphi 0, %s18
    %s21 = sphi 0, %s19
    %s33 = sphi 0, %s35
    %s36 = sphi 0, %s33
    %s37 = sphi 0, %s36
    %s53 = sphi 0, %s37
    %s57 = sphi 0, %s57
    %s59 = sphi 0, %s57
    %s60 = sphi 0, %s59
    %s74 = sphi 0, %s60
    %s78 = sphi 0, %s78
    %s80 = sphi 0, %s78
    %s81 = sphi 0, %s80
    %s95 = sphi 0, %s81
    %s103 = sphi 0, %s105
    %s106 = sphi 0, %s103
    %s107 = sphi 0, %s106
    %s123 = sphi 0, %s107
  $region4: #{res_aspp2_forward.29} parent=0 // loop_header_branch
    %12 = sbr.rel (%p10) target = $region8
  $region5: #{res_aspp2_forward.29} parent=0 // loop_body
    %s14 = ssub.s32 %s9, 1
    %s15 = ssub.s32 %s9, 2
    %s22 = sadd.s32 1, %s17
    %p23 = scmp.ge.s32.totalorder %s22, 1
    %s24 = scalar_select %p23, 0, %s22
    %s25 = sadd.s32 1, %s16
    %s26 = scalar_select %p23, %s25, %s16
    %p27 = scmp.ge.s32.totalorder %s26, 2
    %s28 = scalar_select %p27, 0, %s26
    %s29 = ssub.s32 %s16, %s28
    %s30 = ssub.s32 %s17, %s24
    %s31 = sor.u32 %s29, %s30
    %p32 = scmp.eq.s32.totalorder %s31, 0
    %s34 = sadd.s32 %s33, 1
    %s35 = scalar_select %p32, %s33, %s34
    %p38 = pneg %p32
    %p39 = scmp.eq.s32.totalorder %s9, 1
    %p40 = por %p38, %p39
    %p41 = scmp.ne.s32.totalorder %s33, %s36
    %p42 = scmp.eq.s32.totalorder %s9, 0
    %p43 = por %p41, %p42
    %p44 = scmp.ne.s32.totalorder %s33, %s36
    %p45 = scmp.eq.s32.totalorder %s14, 1
    %p46 = por %p44, %p45
    %p47 = scmp.ne.s32.totalorder %s36, %s37
    %p48 = scmp.eq.s32.totalorder %s14, 0
    %p49 = por %p47, %p48
    %p50 = scmp.ne.s32.totalorder %s36, %s37
    %p51 = scmp.eq.s32.totalorder %s15, 1
    %p52 = por %p50, %p51
    %p54 = scmp.ne.s32.totalorder %s37, %s53
    %p55 = scmp.eq.s32.totalorder %s15, 0
    %p56 = por %p54, %p55
    %s58 = sadd.s32 %s57, 1
    %p61 = scmp.eq.s32.totalorder %s9, 1
    %p62 = scmp.ne.s32.totalorder %s57, %s59
    %p63 = scmp.eq.s32.totalorder %s9, 0
    %p64 = por %p62, %p63
    %p65 = scmp.ne.s32.totalorder %s57, %s59
    %p66 = scmp.eq.s32.totalorder %s14, 1
    %p67 = por %p65, %p66
    %p68 = scmp.ne.s32.totalorder %s59, %s60
    %p69 = scmp.eq.s32.totalorder %s14, 0
    %p70 = por %p68, %p69
    %p71 = scmp.ne.s32.totalorder %s59, %s60
    %p72 = scmp.eq.s32.totalorder %s15, 1
    %p73 = por %p71, %p72
    %p75 = scmp.ne.s32.totalorder %s60, %s74
    %p76 = scmp.eq.s32.totalorder %s15, 0
    %p77 = por %p75, %p76
    %s79 = sadd.s32 %s78, 1
    %p82 = scmp.eq.s32.totalorder %s9, 1
    %p83 = scmp.ne.s32.totalorder %s78, %s80
    %p84 = scmp.eq.s32.totalorder %s9, 0
    %p85 = por %p83, %p84
    %p86 = scmp.ne.s32.totalorder %s78, %s80
    %p87 = scmp.eq.s32.totalorder %s14, 1
    %p88 = por %p86, %p87
    %p89 = scmp.ne.s32.totalorder %s80, %s81
    %p90 = scmp.eq.s32.totalorder %s14, 0
    %p91 = por %p89, %p90
    %p92 = scmp.ne.s32.totalorder %s80, %s81
    %p93 = scmp.eq.s32.totalorder %s15, 1
    %p94 = por %p92, %p93
    %p96 = scmp.ne.s32.totalorder %s81, %s95
    %p97 = scmp.eq.s32.totalorder %s15, 0
    %p98 = por %p96, %p97
    %s99 = ssub.s32 %s16, %s28
    %s100 = ssub.s32 %s17, %s24
    %s101 = sor.u32 %s99, %s100
    %p102 = scmp.eq.s32.totalorder %s101, 0
    %s104 = sadd.s32 %s103, 1
    %s105 = scalar_select %p102, %s103, %s104
    %p108 = pneg %p102
    %p109 = scmp.eq.s32.totalorder %s9, 1
    %p110 = por %p108, %p109
    %p111 = scmp.ne.s32.totalorder %s103, %s106
    %p112 = scmp.eq.s32.totalorder %s9, 0
    %p113 = por %p111, %p112
    %p114 = scmp.ne.s32.totalorder %s103, %s106
    %p115 = scmp.eq.s32.totalorder %s14, 1
    %p116 = por %p114, %p115
    %p117 = scmp.ne.s32.totalorder %s106, %s107
    %p118 = scmp.eq.s32.totalorder %s14, 0
    %p119 = por %p117, %p118
    %p120 = scmp.ne.s32.totalorder %s106, %s107
    %p121 = scmp.eq.s32.totalorder %s15, 1
    %p122 = por %p120, %p121
    %p124 = scmp.ne.s32.totalorder %s107, %s123
    %p125 = scmp.eq.s32.totalorder %s15, 0
    %p126 = por %p124, %p125
    %p127 = scmp.le.s32.totalorder 1, %s9
    %p128 = scmp.lt.s32.totalorder %s9, 3
    %p129 = pnand %p127, %p128
    %p130 = pneg %p129
    // Predicated region
    $region9: #{res_aspp2_forward.29} parent=5 // pred_check
      _
    $region10: #{res_aspp2_forward.29} parent=5 // pred_check_branch
      %132 = sbr.rel (%p129) target = $region12
    $region11: #{res_aspp2_forward.29} parent=5 // pred_region
      %s133 = ssub.s32 %s9, 1
      // Predicated region
      $region13: #{res_aspp2_forward.29} parent=11 // pred_check
        %p134 = pneg %p70
      $region14: #{res_aspp2_forward.29} parent=11 // pred_check_branch
        %136 = sbr.rel (%p134) target = $region16
      $region15: #{res_aspp2_forward.29} parent=11 // pred_region
        _
      $region16: #{res_aspp2_forward.29} parent=11 // pred_fallthru
        _
      // Predicated region
      $region17: #{res_aspp2_forward.29} parent=11 // pred_check
        %p137 = pneg %p91
      $region18: #{res_aspp2_forward.29} parent=11 // pred_check_branch
        %139 = sbr.rel (%p137) target = $region20
      $region19: #{res_aspp2_forward.29} parent=11 // pred_region
        _
      $region20: #{res_aspp2_forward.29} parent=11 // pred_fallthru
        _
    $region12: #{res_aspp2_forward.29} parent=5 // pred_fallthru
      _
    %p140 = scmp.lt.s32.totalorder %s9, 2
    // Predicated region
    $region21: #{res_aspp2_forward.29} parent=5 // pred_check
      %p141 = pneg %p140
    $region22: #{res_aspp2_forward.29} parent=5 // pred_check_branch
      %143 = sbr.rel (%p141) target = $region24
    $region23: #{res_aspp2_forward.29} parent=5 // pred_region
      // Predicated region
      $region25: #{res_aspp2_forward.29} parent=23 // pred_check
        %p144 = pneg %p43
      $region26: #{res_aspp2_forward.29} parent=23 // pred_check_branch
        %146 = sbr.rel (%p144) target = $region28
      $region27: #{res_aspp2_forward.29} parent=23 // pred_region
        %s147 = smul.u32 2, %s17
        %p148 = scmp.lt.s32.totalorder %s16, 1
        %s149 = scalar_select %p148, %s16, 1
        %p150 = scmp.lt.s32.totalorder %s147, 1
        %s151 = scalar_select %p150, %s147, 1
        %s152 = smul.addr %s149, 36
        %s153 = sadd.s32 %s151, %s152
        %s154 = smul.addr %s153, 8
        %s155 = scalar_lea.vmem %s0, %s154
        %s156 = smul.u32 2, %s17
      $region28: #{res_aspp2_forward.29} parent=23 // pred_fallthru
        _
    $region24: #{res_aspp2_forward.29} parent=5 // pred_fallthru
      _
    %p157 = scmp.le.s32.totalorder 1, %s9
    %p158 = scmp.lt.s32.totalorder %s9, 3
    %p159 = pnand %p157, %p158
    %p160 = pneg %p159
    // Predicated region
    $region29: #{res_aspp2_forward.29} parent=5 // pred_check
      _
    $region30: #{res_aspp2_forward.29} parent=5 // pred_check_branch
      %162 = sbr.rel (%p159) target = $region32
    $region31: #{res_aspp2_forward.29} parent=5 // pred_region
      %s163 = ssub.s32 %s9, 1
      %s164 = smul.u32 2, %s19
      %p165 = scmp.lt.s32.totalorder %s18, 1
      %s166 = scalar_select %p165, %s18, 1
      %p167 = scmp.lt.s32.totalorder %s164, 1
      %s168 = scalar_select %p167, %s164, 1
      %s169 = smul.addr %s166, 36
      %s170 = sadd.s32 %s168, %s169
      %s171 = smul.addr %s170, 8
      %s172 = scalar_lea.vmem %s0, %s171
      %p173 = pneg %p49
      %p174 = pneg %p46
      %p175 = pneg %p70
      %p176 = pneg %p67
      %p177 = pneg %p91
      %p178 = pneg %p88
      %p179 = pneg %p119
      %p180 = pneg %p116
      %s181 = smul.u32 2, %s19
      %p182 = scmp.lt.s32.totalorder %s18, 1
      %s183 = scalar_select %p182, %s18, 1
      %p184 = scmp.lt.s32.totalorder %s181, 1
      %s185 = scalar_select %p184, %s181, 1
      %s186 = smul.addr %s183, 2
      %s187 = sadd.s32 %s185, %s186
      %s188 = smul.addr %s187, 4
      %s189 = scalar_lea.vmem %s3, %s188
      %s190 = smul.u32 2, %s19
      %p191 = scmp.lt.s32.totalorder %s18, 1
      %s192 = scalar_select %p191, %s18, 1
      %p193 = scmp.lt.s32.totalorder %s190, 1
      %s194 = scalar_select %p193, %s190, 1
      %s195 = smul.addr %s192, 36
      %s196 = sadd.s32 %s194, %s195
      %s197 = smul.addr %s196, 8
      %s198 = scalar_lea.vmem %s0, %s197
      %s199 = smul.u32 2, %s19
      %s200 = smul.u32 2, %s19
      %p201 = scmp.lt.s32.totalorder %s18, 1
      %s202 = scalar_select %p201, %s18, 1
      %p203 = scmp.lt.s32.totalorder %s200, 1
      %s204 = scalar_select %p203, %s200, 1
      %s205 = smul.addr %s202, 2
      %s206 = sadd.s32 %s204, %s205
      %s207 = smul.addr %s206, 4
      %s208 = scalar_lea.vmem %s3, %s207
      %s209 = smul.u32 2, %s19
      %v210 = vld [vmem:[%s1] sm:$0xff]
      %v211 = vld [vmem:[%s198] sm:$0xff]
      %v212 = vld [vmem:[%s198 + $0x8] sm:$0xff]
      %v213 = vld [vmem:[%s198 + $0x10] sm:$0xff]
      %v214 = vld [vmem:[%s198 + $0x18] sm:$0xff]
      %v215 = vld [vmem:[%s198 + $0x20] sm:$0xff]
      %v216 = vld [vmem:[%s198 + $0x28] sm:$0xff]
      %v217 = vld [vmem:[%s198 + $0x30] sm:$0xff]
      %v218 = vld [vmem:[%s198 + $0x38] sm:$0xff]
      %v219 = vld [vmem:[%s198 + $0x40] sm:$0xff]
      %v220 = vld [vmem:[%s198 + $0x48] sm:$0xff]
      %v221 = vld [vmem:[%s198 + $0x50] sm:$0xff]
      %v222 = vld [vmem:[%s198 + $0x58] sm:$0xff]
      %v223 = vld [vmem:[%s198 + $0x60] sm:$0xff]
      %v224 = vld [vmem:[%s198 + $0x68] sm:$0xff]
      %v225 = vld [vmem:[%s198 + $0x70] sm:$0xff]
      %v226 = vld [vmem:[%s198 + $0x78] sm:$0xff]
      %v227 = vld [vmem:[%s198 + $0x80] sm:$0xff]
      %v228 = vld [vmem:[%s198 + $0x88] sm:$0xff]
      %v229 = vld [vmem:[%s198 + $0x90] sm:$0xff]
      %v230 = vld [vmem:[%s198 + $0x98] sm:$0xff]
      %v231 = vld [vmem:[%s198 + $0xa0] sm:$0xff]
      %v232 = vld [vmem:[%s198 + $0xa8] sm:$0xff]
      %v233 = vld [vmem:[%s198 + $0xb0] sm:$0xff]
      %v234 = vld [vmem:[%s198 + $0xb8] sm:$0xff]
      %v235 = vld [vmem:[%s198 + $0xc0] sm:$0xff]
      %v236 = vld [vmem:[%s198 + $0xc8] sm:$0xff]
      %v237 = vld [vmem:[%s198 + $0xd0] sm:$0xff]
      %v238 = vld [vmem:[%s198 + $0xd8] sm:$0xff]
      %v239 = vld [vmem:[%s198 + $0xe0] sm:$0xff]
      %v240 = vld [vmem:[%s198 + $0xe8] sm:$0xff]
      %v241 = vld [vmem:[%s198 + $0xf0] sm:$0xff]
      %v242 = vld [vmem:[%s198 + $0xf8] sm:$0xff]
      %v243 = vld [vmem:[%s198 + $0x100] sm:$0xff]
      %v244 = vld [vmem:[%s198 + $0x108] sm:$0xff]
      %v245 = vld [vmem:[%s198 + $0x110] sm:$0xff]
      %v246 = vld [vmem:[%s198 + $0x118] sm:$0xff]
      %v247 = vld [vmem:[%s2] sm:$0xf]
      %249 = vset.pattern.permute.xlu0 0
      %250 = vperm.xlu0 %249, %v247
      %v251 = vpop.permute.xlu0 %250
      %v254 = vcombine.high %v210, %v210
      %vm255 = vcmask 130048
      %v256 = vsel %vm255, %v254, 0
      %258 = vmatprep.subr.mxu0 %v242
      %259 = vmatpush1.msra.mxu0 %v241
      %260 = vmatprep.subr.mxu0 %v240
      %261 = vmatpush1.msra.mxu0 %v239
      %262 = vmatprep.subr.mxu0 %v238
      %263 = vmatpush1.msra.mxu0 %v237
      %264 = vmatprep.subr.mxu0 %v236
      %265 = vmatpush1.msra.mxu0 %v235
      %266 = vmatprep.subr.mxu0 %v234
      %267 = vmatpush1.msra.mxu0 %v233
      %268 = vmatprep.subr.mxu0 %v232
      %269 = vmatpush1.msra.mxu0 %v231
      %270 = vmatprep.subr.mxu0 %v230
      %271 = vmatpush1.msra.mxu0 %v229
      %272 = vmatprep.subr.mxu0 %v228
      %273 = vmatpush1.msra.mxu0 %v227
      %274 = vmatprep.subr.mxu0 %v226
      %275 = vmatpush1.msra.mxu0 %v225
      %276 = vmatprep.subr.mxu0 %v224
      %277 = vmatpush1.msra.mxu0 %v223
      %278 = vmatprep.subr.mxu0 %v222
      %279 = vmatpush1.msra.mxu0 %v221
      %280 = vmatprep.subr.mxu0 %v220
      %281 = vmatpush1.msra.mxu0 %v219
      %282 = vmatprep.subr.mxu0 %v218
      %283 = vmatpush1.msra.mxu0 %v217
      %284 = vmatprep.subr.mxu0 %v216
      %285 = vmatpush1.msra.mxu0 %v215
      %286 = vmatprep.subr.mxu0 %v214
      %287 = vmatpush1.msra.mxu0 %v213
      %288 = vmatprep.subr.mxu0 %v212
      %289 = vmatpush1.msra.mxu0 %v211
      %290 = vmatprep.subr.mxu0 0.0
      %291 = vmatpush2.msra.mxu0 0.0
      %292 = vmatprep.subr.mxu0 0.0
      %293 = vmatpush2.msra.mxu0 0.0
      %294 = vmatprep.subr.mxu0 0.0
      %295 = vmatpush2.msra.mxu0 0.0
      %296 = vmatprep.subr.mxu0 0.0
      %297 = vmatpush2.msra.mxu0 0.0
      %298 = vmatprep.subr.mxu0 0.0
      %299 = vmatpush2.msra.mxu0 0.0
      %300 = vmatprep.subr.mxu0 0.0
      %301 = vmatpush2.msra.mxu0 0.0
      %302 = vmatprep.subr.mxu0 0.0
      %303 = vmatpush2.msra.mxu0 0.0
      %304 = vmatprep.subr.mxu0 0.0
      %305 = vmatpush2.msra.mxu0 0.0
      %306 = vmatprep.subr.mxu0 0.0
      %307 = vmatpush2.msra.mxu0 0.0
      %308 = vmatprep.subr.mxu0 0.0
      %309 = vmatpush2.msra.mxu0 0.0
      %310 = vmatprep.subr.mxu0 0.0
      %311 = vmatpush2.msra.mxu0 0.0
      %312 = vmatprep.subr.mxu0 0.0
      %313 = vmatpush2.msra.mxu0 0.0
      %314 = vmatprep.subr.mxu0 0.0
      %315 = vmatpush2.msra.mxu0 0.0
      %316 = vmatprep.subr.mxu0 0.0
      %317 = vmatpush2.msra.mxu0 0.0
      %318 = vmatprep.subr.mxu0 %v246
      %319 = vmatpush2.msra.mxu0 %v245
      %320 = vmatprep.subr.mxu0 %v244
      %321 = vmatpush2.msra.mxu0 %v243
      %322 = vmatprep.mubr.f32.mxu0 %v256
      %323 = vmatmul.mubr.f32.gmra.mxu0 %v210
      %v324 = vpop.f32.mrf.mxu0
      %v325 = vadd.f32 %v251, %v324
      %v326 = vpop.f32.mrf.mxu0
      %v327 = vadd.f32 %v251, %v326
      %328 = vdwg.mxu0
      %v329 = vmax.f32 %v325, 0.0
      %v330 = vmax.f32 %v327, 0.0
      %v333 = vcombine.low %v329, %v330
      %335 = vst [vmem:[%s208] sm:$0xff] %v333
      %s336 = smul.u32 2, %s19
      %p337 = scmp.lt.s32.totalorder %s18, 1
      %s338 = scalar_select %p337, %s18, 1
      %p339 = scmp.lt.s32.totalorder %s336, 1
      %s340 = scalar_select %p339, %s336, 1
      %s341 = smul.addr %s338, 2
      %s342 = sadd.s32 %s340, %s341
      %s343 = smul.addr %s342, 4
      %s344 = scalar_lea.vmem %s3, %s343
      // Predicated region
      $region33: #{res_aspp2_forward.29} parent=31 // pred_check
        %p345 = pneg %p116
      $region34: #{res_aspp2_forward.29} parent=31 // pred_check_branch
        %347 = sbr.rel (%p345) target = $region36
      $region35: #{res_aspp2_forward.29} parent=31 // pred_region
        %s348 = smul.u32 2, %s19
      $region36: #{res_aspp2_forward.29} parent=31 // pred_fallthru
        _
    $region32: #{res_aspp2_forward.29} parent=5 // pred_fallthru
      _
    %p349 = scmp.le.s32.totalorder 2, %s9
    // Predicated region
    $region37: #{res_aspp2_forward.29} parent=5 // pred_check
      %p350 = pneg %p349
    $region38: #{res_aspp2_forward.29} parent=5 // pred_check_branch
      %352 = sbr.rel (%p350) target = $region40
    $region39: #{res_aspp2_forward.29} parent=5 // pred_region
      %s353 = ssub.s32 %s9, 2
      // Predicated region
      $region41: #{res_aspp2_forward.29} parent=39 // pred_check
        %p354 = pneg %p122
      $region42: #{res_aspp2_forward.29} parent=39 // pred_check_branch
        %356 = sbr.rel (%p354) target = $region44
      $region43: #{res_aspp2_forward.29} parent=39 // pred_region
        %s357 = smul.u32 2, %s21
        %p358 = scmp.lt.s32.totalorder %s20, 1
        %s359 = scalar_select %p358, %s20, 1
        %p360 = scmp.lt.s32.totalorder %s357, 1
        %s361 = scalar_select %p360, %s357, 1
        %s362 = smul.addr %s359, 2
        %s363 = sadd.s32 %s361, %s362
        %s364 = smul.addr %s363, 4
        %s365 = scalar_lea.vmem %s3, %s364
      $region44: #{res_aspp2_forward.29} parent=39 // pred_fallthru
        _
    $region40: #{res_aspp2_forward.29} parent=5 // pred_fallthru
      _
  $region6: #{res_aspp2_forward.29} parent=0 // loop_footer
    %s13 = sadd.s32 1, %s9
  $region7: #{res_aspp2_forward.29} parent=0 // loop_footer_branch
    %8 = sbr.rel target = $region3
  $region8: #{res_aspp2_forward.29} parent=0 // loop_exit
    _

// kernel: res_aspp2_forward.33
$region0: #{res_aspp2_forward.33}
  #allocation0 [shape = 'u32[]', space=smem, size = 0x4, offset = 0x4, fixed_abs, tag = 'smem constant byte address 0x4 - core index']
  #allocation1 [shape = 'u32[144,128]{1,0:T(1,128)}', space=vmem, size = 0x12000, scoped, tag = 'internal scratch']
  #allocation2 [shape = 'f32[1,1]{1,0:T(1,128)S(1)}', space=vmem, size = 0x200, scoped, tag = 'scoped memory for res_aspp2_forward.33']
  %s0 = inlined_call_operand.vmem [shape: f32[2,36,256], index: 0, kind: input, shape index: {}]
  %s1 = inlined_call_operand.vmem [shape: f32[1,36], index: 1, kind: input, shape index: {}]
  %s2 = inlined_call_operand.<no memory space> [shape: f32[1,1], index: 2, kind: input, shape index: {}]
  %s3 = inlined_call_operand.vmem [shape: f32[2,1,256], index: 3, kind: output, shape index: {}]
  %s4 = sld [smem:[#allocation0]]
  $region45: #{res_aspp2_forward.33} parent=0
    _
  %s6 = ssub.s32 1, %s4
  %s7 = scalar_select 0, %s6, %s4
  %v8 = vstv %s2
  %9 = vst [vmem:[#allocation2] sm:$0x1] %v8
  loop: start=0, step=1, limit=4
  $region2: #{res_aspp2_forward.33} parent=0 // loop_pre_header
    _
  $region3: #{res_aspp2_forward.33} parent=0 // loop_header
    %s11 = sphi 0, %s15
    %p12 = scmp.ge.s32.totalorder %s11, 4
    %s18 = sphi 0, %s30
    %s19 = sphi 0, %s26
    %s20 = sphi 0, %s18
    %s21 = sphi 0, %s19
    %s22 = sphi 0, %s20
    %s23 = sphi 0, %s21
    %s35 = sphi 0, %s37
    %s38 = sphi 0, %s35
    %s39 = sphi 0, %s38
    %s55 = sphi 0, %s39
    %s59 = sphi 0, %s59
    %s61 = sphi 0, %s59
    %s62 = sphi 0, %s61
    %s76 = sphi 0, %s62
    %s80 = sphi 0, %s80
    %s82 = sphi 0, %s80
    %s83 = sphi 0, %s82
    %s97 = sphi 0, %s83
    %s105 = sphi 0, %s107
    %s108 = sphi 0, %s105
    %s109 = sphi 0, %s108
    %s125 = sphi 0, %s109
  $region4: #{res_aspp2_forward.33} parent=0 // loop_header_branch
    %14 = sbr.rel (%p12) target = $region8
  $region5: #{res_aspp2_forward.33} parent=0 // loop_body
    %s16 = ssub.s32 %s11, 1
    %s17 = ssub.s32 %s11, 2
    %s24 = sadd.s32 1, %s19
    %p25 = scmp.ge.s32.totalorder %s24, 1
    %s26 = scalar_select %p25, 0, %s24
    %s27 = sadd.s32 1, %s18
    %s28 = scalar_select %p25, %s27, %s18
    %p29 = scmp.ge.s32.totalorder %s28, 2
    %s30 = scalar_select %p29, 0, %s28
    %s31 = ssub.s32 %s18, %s30
    %s32 = ssub.s32 %s19, %s26
    %s33 = sor.u32 %s31, %s32
    %p34 = scmp.eq.s32.totalorder %s33, 0
    %s36 = sadd.s32 %s35, 1
    %s37 = scalar_select %p34, %s35, %s36
    %p40 = pneg %p34
    %p41 = scmp.eq.s32.totalorder %s11, 1
    %p42 = por %p40, %p41
    %p43 = scmp.ne.s32.totalorder %s35, %s38
    %p44 = scmp.eq.s32.totalorder %s11, 0
    %p45 = por %p43, %p44
    %p46 = scmp.ne.s32.totalorder %s35, %s38
    %p47 = scmp.eq.s32.totalorder %s16, 1
    %p48 = por %p46, %p47
    %p49 = scmp.ne.s32.totalorder %s38, %s39
    %p50 = scmp.eq.s32.totalorder %s16, 0
    %p51 = por %p49, %p50
    %p52 = scmp.ne.s32.totalorder %s38, %s39
    %p53 = scmp.eq.s32.totalorder %s17, 1
    %p54 = por %p52, %p53
    %p56 = scmp.ne.s32.totalorder %s39, %s55
    %p57 = scmp.eq.s32.totalorder %s17, 0
    %p58 = por %p56, %p57
    %s60 = sadd.s32 %s59, 1
    %p63 = scmp.eq.s32.totalorder %s11, 1
    %p64 = scmp.ne.s32.totalorder %s59, %s61
    %p65 = scmp.eq.s32.totalorder %s11, 0
    %p66 = por %p64, %p65
    %p67 = scmp.ne.s32.totalorder %s59, %s61
    %p68 = scmp.eq.s32.totalorder %s16, 1
    %p69 = por %p67, %p68
    %p70 = scmp.ne.s32.totalorder %s61, %s62
    %p71 = scmp.eq.s32.totalorder %s16, 0
    %p72 = por %p70, %p71
    %p73 = scmp.ne.s32.totalorder %s61, %s62
    %p74 = scmp.eq.s32.totalorder %s17, 1
    %p75 = por %p73, %p74
    %p77 = scmp.ne.s32.totalorder %s62, %s76
    %p78 = scmp.eq.s32.totalorder %s17, 0
    %p79 = por %p77, %p78
    %s81 = sadd.s32 %s80, 1
    %p84 = scmp.eq.s32.totalorder %s11, 1
    %p85 = scmp.ne.s32.totalorder %s80, %s82
    %p86 = scmp.eq.s32.totalorder %s11, 0
    %p87 = por %p85, %p86
    %p88 = scmp.ne.s32.totalorder %s80, %s82
    %p89 = scmp.eq.s32.totalorder %s16, 1
    %p90 = por %p88, %p89
    %p91 = scmp.ne.s32.totalorder %s82, %s83
    %p92 = scmp.eq.s32.totalorder %s16, 0
    %p93 = por %p91, %p92
    %p94 = scmp.ne.s32.totalorder %s82, %s83
    %p95 = scmp.eq.s32.totalorder %s17, 1
    %p96 = por %p94, %p95
    %p98 = scmp.ne.s32.totalorder %s83, %s97
    %p99 = scmp.eq.s32.totalorder %s17, 0
    %p100 = por %p98, %p99
    %s101 = ssub.s32 %s18, %s30
    %s102 = ssub.s32 %s19, %s26
    %s103 = sor.u32 %s101, %s102
    %p104 = scmp.eq.s32.totalorder %s103, 0
    %s106 = sadd.s32 %s105, 1
    %s107 = scalar_select %p104, %s105, %s106
    %p110 = pneg %p104
    %p111 = scmp.eq.s32.totalorder %s11, 1
    %p112 = por %p110, %p111
    %p113 = scmp.ne.s32.totalorder %s105, %s108
    %p114 = scmp.eq.s32.totalorder %s11, 0
    %p115 = por %p113, %p114
    %p116 = scmp.ne.s32.totalorder %s105, %s108
    %p117 = scmp.eq.s32.totalorder %s16, 1
    %p118 = por %p116, %p117
    %p119 = scmp.ne.s32.totalorder %s108, %s109
    %p120 = scmp.eq.s32.totalorder %s16, 0
    %p121 = por %p119, %p120
    %p122 = scmp.ne.s32.totalorder %s108, %s109
    %p123 = scmp.eq.s32.totalorder %s17, 1
    %p124 = por %p122, %p123
    %p126 = scmp.ne.s32.totalorder %s109, %s125
    %p127 = scmp.eq.s32.totalorder %s17, 0
    %p128 = por %p126, %p127
    %p129 = scmp.le.s32.totalorder 1, %s11
    %p130 = scmp.lt.s32.totalorder %s11, 3
    %p131 = pnand %p129, %p130
    %p132 = pneg %p131
    // Predicated region
    $region9: #{res_aspp2_forward.33} parent=5 // pred_check
      _
    $region10: #{res_aspp2_forward.33} parent=5 // pred_check_branch
      %134 = sbr.rel (%p131) target = $region12
    $region11: #{res_aspp2_forward.33} parent=5 // pred_region
      %s135 = ssub.s32 %s11, 1
      // Predicated region
      $region13: #{res_aspp2_forward.33} parent=11 // pred_check
        %p136 = pneg %p72
      $region14: #{res_aspp2_forward.33} parent=11 // pred_check_branch
        %138 = sbr.rel (%p136) target = $region16
      $region15: #{res_aspp2_forward.33} parent=11 // pred_region
        _
      $region16: #{res_aspp2_forward.33} parent=11 // pred_fallthru
        _
      // Predicated region
      $region17: #{res_aspp2_forward.33} parent=11 // pred_check
        %p139 = pneg %p93
      $region18: #{res_aspp2_forward.33} parent=11 // pred_check_branch
        %141 = sbr.rel (%p139) target = $region20
      $region19: #{res_aspp2_forward.33} parent=11 // pred_region
        _
      $region20: #{res_aspp2_forward.33} parent=11 // pred_fallthru
        _
    $region12: #{res_aspp2_forward.33} parent=5 // pred_fallthru
      _
    %p142 = scmp.lt.s32.totalorder %s11, 2
    // Predicated region
    $region21: #{res_aspp2_forward.33} parent=5 // pred_check
      %p143 = pneg %p142
    $region22: #{res_aspp2_forward.33} parent=5 // pred_check_branch
      %145 = sbr.rel (%p143) target = $region24
    $region23: #{res_aspp2_forward.33} parent=5 // pred_region
      // Predicated region
      $region25: #{res_aspp2_forward.33} parent=23 // pred_check
        %p146 = pneg %p45
      $region26: #{res_aspp2_forward.33} parent=23 // pred_check_branch
        %148 = sbr.rel (%p146) target = $region28
      $region27: #{res_aspp2_forward.33} parent=23 // pred_region
        %s149 = smul.u32 2, %s19
        %p150 = scmp.lt.s32.totalorder %s18, 1
        %s151 = scalar_select %p150, %s18, 1
        %p152 = scmp.lt.s32.totalorder %s149, 1
        %s153 = scalar_select %p152, %s149, 1
        %s154 = smul.addr %s151, 10
        %s155 = sadd.s32 %s153, %s154
        %s156 = smul.addr %s155, 8
        %s157 = scalar_lea.vmem %s0, %s156
        %s158 = smul.u32 2, %s19
      $region28: #{res_aspp2_forward.33} parent=23 // pred_fallthru
        _
    $region24: #{res_aspp2_forward.33} parent=5 // pred_fallthru
      _
    %p159 = scmp.le.s32.totalorder 1, %s11
    %p160 = scmp.lt.s32.totalorder %s11, 3
    %p161 = pnand %p159, %p160
    %p162 = pneg %p161
    // Predicated region
    $region29: #{res_aspp2_forward.33} parent=5 // pred_check
      _
    $region30: #{res_aspp2_forward.33} parent=5 // pred_check_branch
      %164 = sbr.rel (%p161) target = $region32
    $region31: #{res_aspp2_forward.33} parent=5 // pred_region
      %s165 = ssub.s32 %s11, 1
      %s166 = smul.u32 2, %s21
      %p167 = scmp.lt.s32.totalorder %s20, 1
      %s168 = scalar_select %p167, %s20, 1
      %p169 = scmp.lt.s32.totalorder %s166, 1
      %s170 = scalar_select %p169, %s166, 1
      %s171 = smul.addr %s168, 10
      %s172 = sadd.s32 %s170, %s171
      %s173 = smul.addr %s172, 8
      %s174 = scalar_lea.vmem %s0, %s173
      %p175 = pneg %p51
      %p176 = pneg %p48
      %p177 = pneg %p72
      %p178 = pneg %p69
      %p179 = pneg %p93
      %p180 = pneg %p90
      %p181 = pneg %p121
      %p182 = pneg %p118
      %s183 = smul.u32 2, %s21
      %p184 = scmp.lt.s32.totalorder %s20, 1
      %s185 = scalar_select %p184, %s20, 1
      %p186 = scmp.lt.s32.totalorder %s183, 1
      %s187 = scalar_select %p186, %s183, 1
      %s188 = smul.addr %s185, 2
      %s189 = sadd.s32 %s187, %s188
      %s190 = scalar_lea.vmem %s3, %s189
      %s191 = smul.u32 2, %s21
      %p192 = scmp.lt.s32.totalorder %s20, 1
      %s193 = scalar_select %p192, %s20, 1
      %p194 = scmp.lt.s32.totalorder %s191, 1
      %s195 = scalar_select %p194, %s191, 1
      %s196 = smul.addr %s193, 10
      %s197 = sadd.s32 %s195, %s196
      %s198 = smul.addr %s197, 8
      %s199 = scalar_lea.vmem %s0, %s198
      %s200 = smul.u32 2, %s21
      %s201 = smul.u32 2, %s21
      %p202 = scmp.lt.s32.totalorder %s20, 1
      %s203 = scalar_select %p202, %s20, 1
      %p204 = scmp.lt.s32.totalorder %s201, 1
      %s205 = scalar_select %p204, %s201, 1
      %s206 = smul.addr %s203, 2
      %s207 = sadd.s32 %s205, %s206
      %s208 = scalar_lea.vmem %s3, %s207
      %s209 = smul.u32 2, %s21
      %v210 = vld [vmem:[%s1] sm:$0x1]
      %v211 = vld [vmem:[%s199] sm:$0xff]
      %v212 = vld [vmem:[%s199 + $0x8] sm:$0xff]
      %v213 = vld [vmem:[%s199 + $0x10] sm:$0xff]
      %v214 = vld [vmem:[%s199 + $0x18] sm:$0xff]
      %v215 = vld [vmem:[%s199 + $0x20] sm:$0xff]
      %v216 = vld [vmem:[%s199 + $0x28] sm:$0xff]
      %v217 = vld [vmem:[%s199 + $0x30] sm:$0xff]
      %v218 = vld [vmem:[%s199 + $0x38] sm:$0xff]
      %v219 = vld [vmem:[%s199 + $0x40] sm:$0xf]
      %v220 = vld [vmem:[%s199 + $0x48] sm:$0xf]
      %v221 = vld [vmem:[#allocation2] sm:$0x1]
      %223 = vset.pattern.permute.xlu0 0
      %224 = vperm.xlu0 %223, %v221
      %v225 = vpop.permute.xlu0 %224
      %v227 = vlaneseq
      %v228 = vshrl.u32 %v227, 7
      %v229 = vsub.s32 0, %v228
      %v230 = vrot.slane %v225, %v229
      %vm231 = vcmask 293888
      %v233 = vsel %vm231, %v210, 0
      %vm235 = vcmask 1043456
      %v237 = vsel %vm235, %v219, 0
      %v240 = vsel %vm235, %v220, 0
      %242 = vmatprep.subr.mxu0 0.0
      %243 = vmatpush1.msra.mxu0 0.0
      %244 = vmatprep.subr.mxu0 0.0
      %245 = vmatpush1.msra.mxu0 0.0
      %246 = vmatprep.subr.mxu0 0.0
      %247 = vmatpush1.msra.mxu0 0.0
      %248 = vmatprep.subr.mxu0 0.0
      %249 = vmatpush1.msra.mxu0 0.0
      %250 = vmatprep.subr.mxu0 0.0
      %251 = vmatpush1.msra.mxu0 0.0
      %252 = vmatprep.subr.mxu0 0.0
      %253 = vmatpush1.msra.mxu0 0.0
      %254 = vmatprep.subr.mxu0 0.0
      %255 = vmatpush1.msra.mxu0 0.0
      %256 = vmatprep.subr.mxu0 0.0
      %257 = vmatpush1.msra.mxu0 0.0
      %258 = vmatprep.subr.mxu0 0.0
      %259 = vmatpush1.msra.mxu0 0.0
      %260 = vmatprep.subr.mxu0 0.0
      %261 = vmatpush1.msra.mxu0 0.0
      %262 = vmatprep.subr.mxu0 0.0
      %263 = vmatpush1.msra.mxu0 0.0
      %264 = vmatprep.subr.mxu0 %v240
      %265 = vmatpush1.msra.mxu0 %v237
      %266 = vmatprep.subr.mxu0 %v218
      %267 = vmatpush1.msra.mxu0 %v217
      %268 = vmatprep.subr.mxu0 %v216
      %269 = vmatpush1.msra.mxu0 %v215
      %270 = vmatprep.subr.mxu0 %v214
      %271 = vmatpush1.msra.mxu0 %v213
      %272 = vmatprep.subr.mxu0 %v212
      %273 = vmatpush1.msra.mxu0 %v211
      %274 = vmatprep.subr.mxu0 0.0
      %275 = vmatpush2.msra.mxu0 0.0
      %276 = vmatprep.subr.mxu0 0.0
      %277 = vmatpush2.msra.mxu0 0.0
      %278 = vmatprep.subr.mxu0 0.0
      %279 = vmatpush2.msra.mxu0 0.0
      %280 = vmatprep.subr.mxu0 0.0
      %281 = vmatpush2.msra.mxu0 0.0
      %282 = vmatprep.subr.mxu0 0.0
      %283 = vmatpush2.msra.mxu0 0.0
      %284 = vmatprep.subr.mxu0 0.0
      %285 = vmatpush2.msra.mxu0 0.0
      %286 = vmatprep.subr.mxu0 0.0
      %287 = vmatpush2.msra.mxu0 0.0
      %288 = vmatprep.subr.mxu0 0.0
      %289 = vmatpush2.msra.mxu0 0.0
      %290 = vmatprep.subr.mxu0 0.0
      %291 = vmatpush2.msra.mxu0 0.0
      %292 = vmatprep.subr.mxu0 0.0
      %293 = vmatpush2.msra.mxu0 0.0
      %294 = vmatprep.subr.mxu0 0.0
      %295 = vmatpush2.msra.mxu0 0.0
      %296 = vmatprep.subr.mxu0 0.0
      %297 = vmatpush2.msra.mxu0 0.0
      %298 = vmatprep.subr.mxu0 0.0
      %299 = vmatpush2.msra.mxu0 0.0
      %300 = vmatprep.subr.mxu0 0.0
      %301 = vmatpush2.msra.mxu0 0.0
      %302 = vmatprep.subr.mxu0 0.0
      %303 = vmatpush2.msra.mxu0 0.0
      %304 = vmatprep.subr.mxu0 0.0
      %305 = vmatpush2.msra.mxu0 0.0
      %306 = vmatprep.mubr.f32.mxu0 0.0
      %307 = vmatmul.mubr.f32.gmra.mxu0 %v233
      %v308 = vpop.f32.mrf.mxu0
      %v309 = vadd.f32 %v230, %v308
      %v310 = vpop.f32.mrf.mxu0
      %v311 = vadd.f32 %v230, %v310
      %312 = vdwg.mxu0
      %v313 = vmax.f32 %v309, 0.0
      %v314 = vmax.f32 %v311, 0.0
      %v317 = vcombine.low %v313, %v314
      %v319 = vunpack.c.l.s4 1966171168
      %v320 = vunpack.c.0.s8 %v319
      %v321 = vlaneseq
      %v322 = vshrl.u32 %v321, 7
      %v323 = vsub.s32 %v320, %v322
      %v324 = vrot.slane %v317, %v323
      %v326 = vunpack.c.l.s4 1966171168
      %v327 = vunpack.c.0.s8 %v326
      %v328 = vlaneseq
      %v329 = vshrl.u32 %v328, 7
      %v330 = vsub.s32 %v327, %v329
      %v331 = vrot.slane %v324, %v330
      %v333 = vlaneseq
      %vm334 = vcmp.ge.s32.totalorder %v333, 0
      %vm335 = vcmp.lt.s32.totalorder %v333, 256
      %vm336 = vmand %vm334, %vm335
      %337 = vst.msk [vmem:[%s208] sm:$0x3] %vm336, %v331
      %s338 = smul.u32 2, %s21
      %p339 = scmp.lt.s32.totalorder %s20, 1
      %s340 = scalar_select %p339, %s20, 1
      %p341 = scmp.lt.s32.totalorder %s338, 1
      %s342 = scalar_select %p341, %s338, 1
      %s343 = smul.addr %s340, 2
      %s344 = sadd.s32 %s342, %s343
      %s345 = scalar_lea.vmem %s3, %s344
      // Predicated region
      $region33: #{res_aspp2_forward.33} parent=31 // pred_check
        %p346 = pneg %p118
      $region34: #{res_aspp2_forward.33} parent=31 // pred_check_branch
        %348 = sbr.rel (%p346) target = $region36
      $region35: #{res_aspp2_forward.33} parent=31 // pred_region
        %s349 = smul.u32 2, %s21
      $region36: #{res_aspp2_forward.33} parent=31 // pred_fallthru
        _
    $region32: #{res_aspp2_forward.33} parent=5 // pred_fallthru
      _
    %p350 = scmp.le.s32.totalorder 2, %s11
    // Predicated region
    $region37: #{res_aspp2_forward.33} parent=5 // pred_check
      %p351 = pneg %p350
    $region38: #{res_aspp2_forward.33} parent=5 // pred_check_branch
      %353 = sbr.rel (%p351) target = $region40
    $region39: #{res_aspp2_forward.33} parent=5 // pred_region
      %s354 = ssub.s32 %s11, 2
      // Predicated region
      $region41: #{res_aspp2_forward.33} parent=39 // pred_check
        %p355 = pneg %p124
      $region42: #{res_aspp2_forward.33} parent=39 // pred_check_branch
        %357 = sbr.rel (%p355) target = $region44
      $region43: #{res_aspp2_forward.33} parent=39 // pred_region
        %s358 = smul.u32 2, %s23
        %p359 = scmp.lt.s32.totalorder %s22, 1
        %s360 = scalar_select %p359, %s22, 1
        %p361 = scmp.lt.s32.totalorder %s358, 1
        %s362 = scalar_select %p361, %s358, 1
        %s363 = smul.addr %s360, 2
        %s364 = sadd.s32 %s362, %s363
        %s365 = scalar_lea.vmem %s3, %s364
      $region44: #{res_aspp2_forward.33} parent=39 // pred_fallthru
        _
    $region40: #{res_aspp2_forward.33} parent=5 // pred_fallthru
      _
  $region6: #{res_aspp2_forward.33} parent=0 // loop_footer
    %s15 = sadd.s32 1, %s11
  $region7: #{res_aspp2_forward.33} parent=0 // loop_footer_branch
    %10 = sbr.rel target = $region3
  $region8: #{res_aspp2_forward.33} parent=0 // loop_exit
    _

// kernel: res_aspp2_forward.49
$region0: #{res_aspp2_forward.49}
  #allocation0 [shape = 'u32[]', space=smem, size = 0x4, offset = 0x4, fixed_abs, tag = 'smem constant byte address 0x4 - core index']
  #allocation1 [shape = 'u32[144,128]{1,0:T(1,128)}', space=vmem, size = 0x12000, scoped, tag = 'internal scratch']
  %s0 = inlined_call_operand.vmem [shape: f32[2,72,256], index: 0, kind: input, shape index: {}]
  %s1 = inlined_call_operand.vmem [shape: f32[4,72], index: 1, kind: input, shape index: {}]
  %s2 = inlined_call_operand.vmem [shape: f32[4,1], index: 2, kind: input, shape index: {}]
  %s3 = inlined_call_operand.vmem [shape: f32[2,4,256], index: 3, kind: output, shape index: {}]
  %s4 = sld [smem:[#allocation0]]
  $region45: #{res_aspp2_forward.49} parent=0
    _
  %s6 = ssub.s32 1, %s4
  %s7 = scalar_select 0, %s6, %s4
  loop: start=0, step=1, limit=4
  $region2: #{res_aspp2_forward.49} parent=0 // loop_pre_header
    _
  $region3: #{res_aspp2_forward.49} parent=0 // loop_header
    %s9 = sphi 0, %s13
    %p10 = scmp.ge.s32.totalorder %s9, 4
    %s16 = sphi 0, %s28
    %s17 = sphi 0, %s24
    %s18 = sphi 0, %s16
    %s19 = sphi 0, %s17
    %s20 = sphi 0, %s18
    %s21 = sphi 0, %s19
    %s33 = sphi 0, %s35
    %s36 = sphi 0, %s33
    %s37 = sphi 0, %s36
    %s53 = sphi 0, %s37
    %s57 = sphi 0, %s57
    %s59 = sphi 0, %s57
    %s60 = sphi 0, %s59
    %s74 = sphi 0, %s60
    %s78 = sphi 0, %s78
    %s80 = sphi 0, %s78
    %s81 = sphi 0, %s80
    %s95 = sphi 0, %s81
    %s103 = sphi 0, %s105
    %s106 = sphi 0, %s103
    %s107 = sphi 0, %s106
    %s123 = sphi 0, %s107
  $region4: #{res_aspp2_forward.49} parent=0 // loop_header_branch
    %12 = sbr.rel (%p10) target = $region8
  $region5: #{res_aspp2_forward.49} parent=0 // loop_body
    %s14 = ssub.s32 %s9, 1
    %s15 = ssub.s32 %s9, 2
    %s22 = sadd.s32 1, %s17
    %p23 = scmp.ge.s32.totalorder %s22, 1
    %s24 = scalar_select %p23, 0, %s22
    %s25 = sadd.s32 1, %s16
    %s26 = scalar_select %p23, %s25, %s16
    %p27 = scmp.ge.s32.totalorder %s26, 2
    %s28 = scalar_select %p27, 0, %s26
    %s29 = ssub.s32 %s16, %s28
    %s30 = ssub.s32 %s17, %s24
    %s31 = sor.u32 %s29, %s30
    %p32 = scmp.eq.s32.totalorder %s31, 0
    %s34 = sadd.s32 %s33, 1
    %s35 = scalar_select %p32, %s33, %s34
    %p38 = pneg %p32
    %p39 = scmp.eq.s32.totalorder %s9, 1
    %p40 = por %p38, %p39
    %p41 = scmp.ne.s32.totalorder %s33, %s36
    %p42 = scmp.eq.s32.totalorder %s9, 0
    %p43 = por %p41, %p42
    %p44 = scmp.ne.s32.totalorder %s33, %s36
    %p45 = scmp.eq.s32.totalorder %s14, 1
    %p46 = por %p44, %p45
    %p47 = scmp.ne.s32.totalorder %s36, %s37
    %p48 = scmp.eq.s32.totalorder %s14, 0
    %p49 = por %p47, %p48
    %p50 = scmp.ne.s32.totalorder %s36, %s37
    %p51 = scmp.eq.s32.totalorder %s15, 1
    %p52 = por %p50, %p51
    %p54 = scmp.ne.s32.totalorder %s37, %s53
    %p55 = scmp.eq.s32.totalorder %s15, 0
    %p56 = por %p54, %p55
    %s58 = sadd.s32 %s57, 1
    %p61 = scmp.eq.s32.totalorder %s9, 1
    %p62 = scmp.ne.s32.totalorder %s57, %s59
    %p63 = scmp.eq.s32.totalorder %s9, 0
    %p64 = por %p62, %p63
    %p65 = scmp.ne.s32.totalorder %s57, %s59
    %p66 = scmp.eq.s32.totalorder %s14, 1
    %p67 = por %p65, %p66
    %p68 = scmp.ne.s32.totalorder %s59, %s60
    %p69 = scmp.eq.s32.totalorder %s14, 0
    %p70 = por %p68, %p69
    %p71 = scmp.ne.s32.totalorder %s59, %s60
    %p72 = scmp.eq.s32.totalorder %s15, 1
    %p73 = por %p71, %p72
    %p75 = scmp.ne.s32.totalorder %s60, %s74
    %p76 = scmp.eq.s32.totalorder %s15, 0
    %p77 = por %p75, %p76
    %s79 = sadd.s32 %s78, 1
    %p82 = scmp.eq.s32.totalorder %s9, 1
    %p83 = scmp.ne.s32.totalorder %s78, %s80
    %p84 = scmp.eq.s32.totalorder %s9, 0
    %p85 = por %p83, %p84
    %p86 = scmp.ne.s32.totalorder %s78, %s80
    %p87 = scmp.eq.s32.totalorder %s14, 1
    %p88 = por %p86, %p87
    %p89 = scmp.ne.s32.totalorder %s80, %s81
    %p90 = scmp.eq.s32.totalorder %s14, 0
    %p91 = por %p89, %p90
    %p92 = scmp.ne.s32.totalorder %s80, %s81
    %p93 = scmp.eq.s32.totalorder %s15, 1
    %p94 = por %p92, %p93
    %p96 = scmp.ne.s32.totalorder %s81, %s95
    %p97 = scmp.eq.s32.totalorder %s15, 0
    %p98 = por %p96, %p97
    %s99 = ssub.s32 %s16, %s28
    %s100 = ssub.s32 %s17, %s24
    %s101 = sor.u32 %s99, %s100
    %p102 = scmp.eq.s32.totalorder %s101, 0
    %s104 = sadd.s32 %s103, 1
    %s105 = scalar_select %p102, %s103, %s104
    %p108 = pneg %p102
    %p109 = scmp.eq.s32.totalorder %s9, 1
    %p110 = por %p108, %p109
    %p111 = scmp.ne.s32.totalorder %s103, %s106
    %p112 = scmp.eq.s32.totalorder %s9, 0
    %p113 = por %p111, %p112
    %p114 = scmp.ne.s32.totalorder %s103, %s106
    %p115 = scmp.eq.s32.totalorder %s14, 1
    %p116 = por %p114, %p115
    %p117 = scmp.ne.s32.totalorder %s106, %s107
    %p118 = scmp.eq.s32.totalorder %s14, 0
    %p119 = por %p117, %p118
    %p120 = scmp.ne.s32.totalorder %s106, %s107
    %p121 = scmp.eq.s32.totalorder %s15, 1
    %p122 = por %p120, %p121
    %p124 = scmp.ne.s32.totalorder %s107, %s123
    %p125 = scmp.eq.s32.totalorder %s15, 0
    %p126 = por %p124, %p125
    %p127 = scmp.le.s32.totalorder 1, %s9
    %p128 = scmp.lt.s32.totalorder %s9, 3
    %p129 = pnand %p127, %p128
    %p130 = pneg %p129
    // Predicated region
    $region9: #{res_aspp2_forward.49} parent=5 // pred_check
      _
    $region10: #{res_aspp2_forward.49} parent=5 // pred_check_branch
      %132 = sbr.rel (%p129) target = $region12
    $region11: #{res_aspp2_forward.49} parent=5 // pred_region
      %s133 = ssub.s32 %s9, 1
      // Predicated region
      $region13: #{res_aspp2_forward.49} parent=11 // pred_check
        %p134 = pneg %p70
      $region14: #{res_aspp2_forward.49} parent=11 // pred_check_branch
        %136 = sbr.rel (%p134) target = $region16
      $region15: #{res_aspp2_forward.49} parent=11 // pred_region
        _
      $region16: #{res_aspp2_forward.49} parent=11 // pred_fallthru
        _
      // Predicated region
      $region17: #{res_aspp2_forward.49} parent=11 // pred_check
        %p137 = pneg %p91
      $region18: #{res_aspp2_forward.49} parent=11 // pred_check_branch
        %139 = sbr.rel (%p137) target = $region20
      $region19: #{res_aspp2_forward.49} parent=11 // pred_region
        _
      $region20: #{res_aspp2_forward.49} parent=11 // pred_fallthru
        _
    $region12: #{res_aspp2_forward.49} parent=5 // pred_fallthru
      _
    %p140 = scmp.lt.s32.totalorder %s9, 2
    // Predicated region
    $region21: #{res_aspp2_forward.49} parent=5 // pred_check
      %p141 = pneg %p140
    $region22: #{res_aspp2_forward.49} parent=5 // pred_check_branch
      %143 = sbr.rel (%p141) target = $region24
    $region23: #{res_aspp2_forward.49} parent=5 // pred_region
      // Predicated region
      $region25: #{res_aspp2_forward.49} parent=23 // pred_check
        %p144 = pneg %p43
      $region26: #{res_aspp2_forward.49} parent=23 // pred_check_branch
        %146 = sbr.rel (%p144) target = $region28
      $region27: #{res_aspp2_forward.49} parent=23 // pred_region
        %s147 = smul.u32 2, %s17
        %p148 = scmp.lt.s32.totalorder %s16, 1
        %s149 = scalar_select %p148, %s16, 1
        %p150 = scmp.lt.s32.totalorder %s147, 1
        %s151 = scalar_select %p150, %s147, 1
        %s152 = smul.addr %s149, 18
        %s153 = sadd.s32 %s151, %s152
        %s154 = smul.addr %s153, 8
        %s155 = scalar_lea.vmem %s0, %s154
        %s156 = smul.u32 2, %s17
      $region28: #{res_aspp2_forward.49} parent=23 // pred_fallthru
        _
    $region24: #{res_aspp2_forward.49} parent=5 // pred_fallthru
      _
    %p157 = scmp.le.s32.totalorder 1, %s9
    %p158 = scmp.lt.s32.totalorder %s9, 3
    %p159 = pnand %p157, %p158
    %p160 = pneg %p159
    // Predicated region
    $region29: #{res_aspp2_forward.49} parent=5 // pred_check
      _
    $region30: #{res_aspp2_forward.49} parent=5 // pred_check_branch
      %162 = sbr.rel (%p159) target = $region32
    $region31: #{res_aspp2_forward.49} parent=5 // pred_region
      %s163 = ssub.s32 %s9, 1
      %s164 = smul.u32 2, %s19
      %p165 = scmp.lt.s32.totalorder %s18, 1
      %s166 = scalar_select %p165, %s18, 1
      %p167 = scmp.lt.s32.totalorder %s164, 1
      %s168 = scalar_select %p167, %s164, 1
      %s169 = smul.addr %s166, 18
      %s170 = sadd.s32 %s168, %s169
      %s171 = smul.addr %s170, 8
      %s172 = scalar_lea.vmem %s0, %s171
      %p173 = pneg %p49
      %p174 = pneg %p46
      %p175 = pneg %p70
      %p176 = pneg %p67
      %p177 = pneg %p91
      %p178 = pneg %p88
      %p179 = pneg %p119
      %p180 = pneg %p116
      %s181 = smul.u32 2, %s19
      %p182 = scmp.lt.s32.totalorder %s18, 1
      %s183 = scalar_select %p182, %s18, 1
      %p184 = scmp.lt.s32.totalorder %s181, 1
      %s185 = scalar_select %p184, %s181, 1
      %s186 = smul.addr %s183, 2
      %s187 = sadd.s32 %s185, %s186
      %s188 = smul.addr %s187, 4
      %s189 = scalar_lea.vmem %s3, %s188
      %s190 = smul.u32 2, %s19
      %p191 = scmp.lt.s32.totalorder %s18, 1
      %s192 = scalar_select %p191, %s18, 1
      %p193 = scmp.lt.s32.totalorder %s190, 1
      %s194 = scalar_select %p193, %s190, 1
      %s195 = smul.addr %s192, 18
      %s196 = sadd.s32 %s194, %s195
      %s197 = smul.addr %s196, 8
      %s198 = scalar_lea.vmem %s0, %s197
      %s199 = smul.u32 2, %s19
      %s200 = smul.u32 2, %s19
      %p201 = scmp.lt.s32.totalorder %s18, 1
      %s202 = scalar_select %p201, %s18, 1
      %p203 = scmp.lt.s32.totalorder %s200, 1
      %s204 = scalar_select %p203, %s200, 1
      %s205 = smul.addr %s202, 2
      %s206 = sadd.s32 %s204, %s205
      %s207 = smul.addr %s206, 4
      %s208 = scalar_lea.vmem %s3, %s207
      %s209 = smul.u32 2, %s19
      %v210 = vld [vmem:[%s1] sm:$0xf]
      %v211 = vld [vmem:[%s198] sm:$0xff]
      %v212 = vld [vmem:[%s198 + $0x8] sm:$0xff]
      %v213 = vld [vmem:[%s198 + $0x10] sm:$0xff]
      %v214 = vld [vmem:[%s198 + $0x18] sm:$0xff]
      %v215 = vld [vmem:[%s198 + $0x20] sm:$0xff]
      %v216 = vld [vmem:[%s198 + $0x28] sm:$0xff]
      %v217 = vld [vmem:[%s198 + $0x30] sm:$0xff]
      %v218 = vld [vmem:[%s198 + $0x38] sm:$0xff]
      %v219 = vld [vmem:[%s198 + $0x40] sm:$0xff]
      %v220 = vld [vmem:[%s198 + $0x48] sm:$0xff]
      %v221 = vld [vmem:[%s198 + $0x50] sm:$0xff]
      %v222 = vld [vmem:[%s198 + $0x58] sm:$0xff]
      %v223 = vld [vmem:[%s198 + $0x60] sm:$0xff]
      %v224 = vld [vmem:[%s198 + $0x68] sm:$0xff]
      %v225 = vld [vmem:[%s198 + $0x70] sm:$0xff]
      %v226 = vld [vmem:[%s198 + $0x78] sm:$0xff]
      %v227 = vld [vmem:[%s198 + $0x80] sm:$0xff]
      %v228 = vld [vmem:[%s198 + $0x88] sm:$0xff]
      %v229 = vld [vmem:[%s2] sm:$0xf]
      %231 = vset.pattern.permute.xlu0 0
      %232 = vperm.xlu0 %231, %v229
      %v233 = vpop.permute.xlu0 %232
      %vm235 = vcmask 588800
      %v237 = vsel %vm235, %v210, 0
      %239 = vmatprep.subr.mxu0 0.0
      %240 = vmatpush1.msra.mxu0 0.0
      %241 = vmatprep.subr.mxu0 0.0
      %242 = vmatpush1.msra.mxu0 0.0
      %243 = vmatprep.subr.mxu0 0.0
      %244 = vmatpush1.msra.mxu0 0.0
      %245 = vmatprep.subr.mxu0 0.0
      %246 = vmatpush1.msra.mxu0 0.0
      %247 = vmatprep.subr.mxu0 0.0
      %248 = vmatpush1.msra.mxu0 0.0
      %249 = vmatprep.subr.mxu0 0.0
      %250 = vmatpush1.msra.mxu0 0.0
      %251 = vmatprep.subr.mxu0 0.0
      %252 = vmatpush1.msra.mxu0 0.0
      %253 = vmatprep.subr.mxu0 %v228
      %254 = vmatpush1.msra.mxu0 %v227
      %255 = vmatprep.subr.mxu0 %v226
      %256 = vmatpush1.msra.mxu0 %v225
      %257 = vmatprep.subr.mxu0 %v224
      %258 = vmatpush1.msra.mxu0 %v223
      %259 = vmatprep.subr.mxu0 %v222
      %260 = vmatpush1.msra.mxu0 %v221
      %261 = vmatprep.subr.mxu0 %v220
      %262 = vmatpush1.msra.mxu0 %v219
      %263 = vmatprep.subr.mxu0 %v218
      %264 = vmatpush1.msra.mxu0 %v217
      %265 = vmatprep.subr.mxu0 %v216
      %266 = vmatpush1.msra.mxu0 %v215
      %267 = vmatprep.subr.mxu0 %v214
      %268 = vmatpush1.msra.mxu0 %v213
      %269 = vmatprep.subr.mxu0 %v212
      %270 = vmatpush1.msra.mxu0 %v211
      %271 = vmatprep.subr.mxu0 0.0
      %272 = vmatpush2.msra.mxu0 0.0
      %273 = vmatprep.subr.mxu0 0.0
      %274 = vmatpush2.msra.mxu0 0.0
      %275 = vmatprep.subr.mxu0 0.0
      %276 = vmatpush2.msra.mxu0 0.0
      %277 = vmatprep.subr.mxu0 0.0
      %278 = vmatpush2.msra.mxu0 0.0
      %279 = vmatprep.subr.mxu0 0.0
      %280 = vmatpush2.msra.mxu0 0.0
      %281 = vmatprep.subr.mxu0 0.0
      %282 = vmatpush2.msra.mxu0 0.0
      %283 = vmatprep.subr.mxu0 0.0
      %284 = vmatpush2.msra.mxu0 0.0
      %285 = vmatprep.subr.mxu0 0.0
      %286 = vmatpush2.msra.mxu0 0.0
      %287 = vmatprep.subr.mxu0 0.0
      %288 = vmatpush2.msra.mxu0 0.0
      %289 = vmatprep.subr.mxu0 0.0
      %290 = vmatpush2.msra.mxu0 0.0
      %291 = vmatprep.subr.mxu0 0.0
      %292 = vmatpush2.msra.mxu0 0.0
      %293 = vmatprep.subr.mxu0 0.0
      %294 = vmatpush2.msra.mxu0 0.0
      %295 = vmatprep.subr.mxu0 0.0
      %296 = vmatpush2.msra.mxu0 0.0
      %297 = vmatprep.subr.mxu0 0.0
      %298 = vmatpush2.msra.mxu0 0.0
      %299 = vmatprep.subr.mxu0 0.0
      %300 = vmatpush2.msra.mxu0 0.0
      %301 = vmatprep.subr.mxu0 0.0
      %302 = vmatpush2.msra.mxu0 0.0
      %303 = vmatprep.mubr.f32.mxu0 0.0
      %304 = vmatmul.mubr.f32.gmra.mxu0 %v237
      %v305 = vpop.f32.mrf.mxu0
      %v306 = vadd.f32 %v233, %v305
      %v307 = vpop.f32.mrf.mxu0
      %v308 = vadd.f32 %v233, %v307
      %309 = vdwg.mxu0
      %v310 = vmax.f32 %v306, 0.0
      %v311 = vmax.f32 %v308, 0.0
      %v314 = vcombine.low %v310, %v311
      %316 = vst [vmem:[%s208] sm:$0xff] %v314
      %s317 = smul.u32 2, %s19
      %p318 = scmp.lt.s32.totalorder %s18, 1
      %s319 = scalar_select %p318, %s18, 1
      %p320 = scmp.lt.s32.totalorder %s317, 1
      %s321 = scalar_select %p320, %s317, 1
      %s322 = smul.addr %s319, 2
      %s323 = sadd.s32 %s321, %s322
      %s324 = smul.addr %s323, 4
      %s325 = scalar_lea.vmem %s3, %s324
      // Predicated region
      $region33: #{res_aspp2_forward.49} parent=31 // pred_check
        %p326 = pneg %p116
      $region34: #{res_aspp2_forward.49} parent=31 // pred_check_branch
        %328 = sbr.rel (%p326) target = $region36
      $region35: #{res_aspp2_forward.49} parent=31 // pred_region
        %s329 = smul.u32 2, %s19
      $region36: #{res_aspp2_forward.49} parent=31 // pred_fallthru
        _
    $region32: #{res_aspp2_forward.49} parent=5 // pred_fallthru
      _
    %p330 = scmp.le.s32.totalorder 2, %s9
    // Predicated region
    $region37: #{res_aspp2_forward.49} parent=5 // pred_check
      %p331 = pneg %p330
    $region38: #{res_aspp2_forward.49} parent=5 // pred_check_branch
      %333 = sbr.rel (%p331) target = $region40
    $region39: #{res_aspp2_forward.49} parent=5 // pred_region
      %s334 = ssub.s32 %s9, 2
      // Predicated region
      $region41: #{res_aspp2_forward.49} parent=39 // pred_check
        %p335 = pneg %p122
      $region42: #{res_aspp2_forward.49} parent=39 // pred_check_branch
        %337 = sbr.rel (%p335) target = $region44
      $region43: #{res_aspp2_forward.49} parent=39 // pred_region
        %s338 = smul.u32 2, %s21
        %p339 = scmp.lt.s32.totalorder %s20, 1
        %s340 = scalar_select %p339, %s20, 1
        %p341 = scmp.lt.s32.totalorder %s338, 1
        %s342 = scalar_select %p341, %s338, 1
        %s343 = smul.addr %s340, 2
        %s344 = sadd.s32 %s342, %s343
        %s345 = smul.addr %s344, 4
        %s346 = scalar_lea.vmem %s3, %s345
      $region44: #{res_aspp2_forward.49} parent=39 // pred_fallthru
        _
    $region40: #{res_aspp2_forward.49} parent=5 // pred_fallthru
      _
  $region6: #{res_aspp2_forward.49} parent=0 // loop_footer
    %s13 = sadd.s32 1, %s9
  $region7: #{res_aspp2_forward.49} parent=0 // loop_footer_branch
    %8 = sbr.rel target = $region3
  $region8: #{res_aspp2_forward.49} parent=0 // loop_exit
    _

// kernel: res_aspp2_forward.53
$region0: #{res_aspp2_forward.53}
  #allocation0 [shape = 'u32[]', space=smem, size = 0x4, offset = 0x4, fixed_abs, tag = 'smem constant byte address 0x4 - core index']
  #allocation1 [shape = 'u32[144,128]{1,0:T(1,128)}', space=vmem, size = 0x12000, scoped, tag = 'internal scratch']
  %s0 = inlined_call_operand.vmem [shape: f32[2,288,256], index: 0, kind: input, shape index: {}]
  %s1 = inlined_call_operand.vmem [shape: f32[3,288], index: 1, kind: input, shape index: {}]
  %s2 = inlined_call_operand.vmem [shape: f32[3,1], index: 2, kind: input, shape index: {}]
  %s3 = inlined_call_operand.vmem [shape: f32[2,3,256], index: 3, kind: input, shape index: {}]
  %s4 = inlined_call_operand.vmem [shape: f32[2,3,256], index: 4, kind: output, shape index: {}]
  %s5 = sld [smem:[#allocation0]]
  $region49: #{res_aspp2_forward.53} parent=0
    _
  %s7 = ssub.s32 1, %s5
  %s8 = scalar_select 0, %s7, %s5
  loop: start=0, step=1, limit=4
  $region2: #{res_aspp2_forward.53} parent=0 // loop_pre_header
    _
  $region3: #{res_aspp2_forward.53} parent=0 // loop_header
    %s10 = sphi 0, %s14
    %p11 = scmp.ge.s32.totalorder %s10, 4
    %s17 = sphi 0, %s29
    %s18 = sphi 0, %s25
    %s19 = sphi 0, %s17
    %s20 = sphi 0, %s18
    %s21 = sphi 0, %s19
    %s22 = sphi 0, %s20
    %s34 = sphi 0, %s36
    %s37 = sphi 0, %s34
    %s38 = sphi 0, %s37
    %s54 = sphi 0, %s38
    %s58 = sphi 0, %s58
    %s60 = sphi 0, %s58
    %s61 = sphi 0, %s60
    %s75 = sphi 0, %s61
    %s79 = sphi 0, %s79
    %s81 = sphi 0, %s79
    %s82 = sphi 0, %s81
    %s96 = sphi 0, %s82
    %s104 = sphi 0, %s106
    %s107 = sphi 0, %s104
    %s108 = sphi 0, %s107
    %s124 = sphi 0, %s108
    %s132 = sphi 0, %s134
    %s135 = sphi 0, %s132
    %s136 = sphi 0, %s135
    %s152 = sphi 0, %s136
  $region4: #{res_aspp2_forward.53} parent=0 // loop_header_branch
    %13 = sbr.rel (%p11) target = $region8
  $region5: #{res_aspp2_forward.53} parent=0 // loop_body
    %s15 = ssub.s32 %s10, 1
    %s16 = ssub.s32 %s10, 2
    %s23 = sadd.s32 1, %s18
    %p24 = scmp.ge.s32.totalorder %s23, 1
    %s25 = scalar_select %p24, 0, %s23
    %s26 = sadd.s32 1, %s17
    %s27 = scalar_select %p24, %s26, %s17
    %p28 = scmp.ge.s32.totalorder %s27, 2
    %s29 = scalar_select %p28, 0, %s27
    %s30 = ssub.s32 %s17, %s29
    %s31 = ssub.s32 %s18, %s25
    %s32 = sor.u32 %s30, %s31
    %p33 = scmp.eq.s32.totalorder %s32, 0
    %s35 = sadd.s32 %s34, 1
    %s36 = scalar_select %p33, %s34, %s35
    %p39 = pneg %p33
    %p40 = scmp.eq.s32.totalorder %s10, 1
    %p41 = por %p39, %p40
    %p42 = scmp.ne.s32.totalorder %s34, %s37
    %p43 = scmp.eq.s32.totalorder %s10, 0
    %p44 = por %p42, %p43
    %p45 = scmp.ne.s32.totalorder %s34, %s37
    %p46 = scmp.eq.s32.totalorder %s15, 1
    %p47 = por %p45, %p46
    %p48 = scmp.ne.s32.totalorder %s37, %s38
    %p49 = scmp.eq.s32.totalorder %s15, 0
    %p50 = por %p48, %p49
    %p51 = scmp.ne.s32.totalorder %s37, %s38
    %p52 = scmp.eq.s32.totalorder %s16, 1
    %p53 = por %p51, %p52
    %p55 = scmp.ne.s32.totalorder %s38, %s54
    %p56 = scmp.eq.s32.totalorder %s16, 0
    %p57 = por %p55, %p56
    %s59 = sadd.s32 %s58, 1
    %p62 = scmp.eq.s32.totalorder %s10, 1
    %p63 = scmp.ne.s32.totalorder %s58, %s60
    %p64 = scmp.eq.s32.totalorder %s10, 0
    %p65 = por %p63, %p64
    %p66 = scmp.ne.s32.totalorder %s58, %s60
    %p67 = scmp.eq.s32.totalorder %s15, 1
    %p68 = por %p66, %p67
    %p69 = scmp.ne.s32.totalorder %s60, %s61
    %p70 = scmp.eq.s32.totalorder %s15, 0
    %p71 = por %p69, %p70
    %p72 = scmp.ne.s32.totalorder %s60, %s61
    %p73 = scmp.eq.s32.totalorder %s16, 1
    %p74 = por %p72, %p73
    %p76 = scmp.ne.s32.totalorder %s61, %s75
    %p77 = scmp.eq.s32.totalorder %s16, 0
    %p78 = por %p76, %p77
    %s80 = sadd.s32 %s79, 1
    %p83 = scmp.eq.s32.totalorder %s10, 1
    %p84 = scmp.ne.s32.totalorder %s79, %s81
    %p85 = scmp.eq.s32.totalorder %s10, 0
    %p86 = por %p84, %p85
    %p87 = scmp.ne.s32.totalorder %s79, %s81
    %p88 = scmp.eq.s32.totalorder %s15, 1
    %p89 = por %p87, %p88
    %p90 = scmp.ne.s32.totalorder %s81, %s82
    %p91 = scmp.eq.s32.totalorder %s15, 0
    %p92 = por %p90, %p91
    %p93 = scmp.ne.s32.totalorder %s81, %s82
    %p94 = scmp.eq.s32.totalorder %s16, 1
    %p95 = por %p93, %p94
    %p97 = scmp.ne.s32.totalorder %s82, %s96
    %p98 = scmp.eq.s32.totalorder %s16, 0
    %p99 = por %p97, %p98
    %s100 = ssub.s32 %s17, %s29
    %s101 = ssub.s32 %s18, %s25
    %s102 = sor.u32 %s100, %s101
    %p103 = scmp.eq.s32.totalorder %s102, 0
    %s105 = sadd.s32 %s104, 1
    %s106 = scalar_select %p103, %s104, %s105
    %p109 = pneg %p103
    %p110 = scmp.eq.s32.totalorder %s10, 1
    %p111 = por %p109, %p110
    %p112 = scmp.ne.s32.totalorder %s104, %s107
    %p113 = scmp.eq.s32.totalorder %s10, 0
    %p114 = por %p112, %p113
    %p115 = scmp.ne.s32.totalorder %s104, %s107
    %p116 = scmp.eq.s32.totalorder %s15, 1
    %p117 = por %p115, %p116
    %p118 = scmp.ne.s32.totalorder %s107, %s108
    %p119 = scmp.eq.s32.totalorder %s15, 0
    %p120 = por %p118, %p119
    %p121 = scmp.ne.s32.totalorder %s107, %s108
    %p122 = scmp.eq.s32.totalorder %s16, 1
    %p123 = por %p121, %p122
    %p125 = scmp.ne.s32.totalorder %s108, %s124
    %p126 = scmp.eq.s32.totalorder %s16, 0
    %p127 = por %p125, %p126
    %s128 = ssub.s32 %s17, %s29
    %s129 = ssub.s32 %s18, %s25
    %s130 = sor.u32 %s128, %s129
    %p131 = scmp.eq.s32.totalorder %s130, 0
    %s133 = sadd.s32 %s132, 1
    %s134 = scalar_select %p131, %s132, %s133
    %p137 = pneg %p131
    %p138 = scmp.eq.s32.totalorder %s10, 1
    %p139 = por %p137, %p138
    %p140 = scmp.ne.s32.totalorder %s132, %s135
    %p141 = scmp.eq.s32.totalorder %s10, 0
    %p142 = por %p140, %p141
    %p143 = scmp.ne.s32.totalorder %s132, %s135
    %p144 = scmp.eq.s32.totalorder %s15, 1
    %p145 = por %p143, %p144
    %p146 = scmp.ne.s32.totalorder %s135, %s136
    %p147 = scmp.eq.s32.totalorder %s15, 0
    %p148 = por %p146, %p147
    %p149 = scmp.ne.s32.totalorder %s135, %s136
    %p150 = scmp.eq.s32.totalorder %s16, 1
    %p151 = por %p149, %p150
    %p153 = scmp.ne.s32.totalorder %s136, %s152
    %p154 = scmp.eq.s32.totalorder %s16, 0
    %p155 = por %p153, %p154
    %p156 = scmp.le.s32.totalorder 1, %s10
    %p157 = scmp.lt.s32.totalorder %s10, 3
    %p158 = pnand %p156, %p157
    %p159 = pneg %p158
    // Predicated region
    $region9: #{res_aspp2_forward.53} parent=5 // pred_check
      _
    $region10: #{res_aspp2_forward.53} parent=5 // pred_check_branch
      %161 = sbr.rel (%p158) target = $region12
    $region11: #{res_aspp2_forward.53} parent=5 // pred_region
      %s162 = ssub.s32 %s10, 1
      // Predicated region
      $region13: #{res_aspp2_forward.53} parent=11 // pred_check
        %p163 = pneg %p71
      $region14: #{res_aspp2_forward.53} parent=11 // pred_check_branch
        %165 = sbr.rel (%p163) target = $region16
      $region15: #{res_aspp2_forward.53} parent=11 // pred_region
        _
      $region16: #{res_aspp2_forward.53} parent=11 // pred_fallthru
        _
      // Predicated region
      $region17: #{res_aspp2_forward.53} parent=11 // pred_check
        %p166 = pneg %p92
      $region18: #{res_aspp2_forward.53} parent=11 // pred_check_branch
        %168 = sbr.rel (%p166) target = $region20
      $region19: #{res_aspp2_forward.53} parent=11 // pred_region
        _
      $region20: #{res_aspp2_forward.53} parent=11 // pred_fallthru
        _
    $region12: #{res_aspp2_forward.53} parent=5 // pred_fallthru
      _
    %p169 = scmp.lt.s32.totalorder %s10, 2
    // Predicated region
    $region21: #{res_aspp2_forward.53} parent=5 // pred_check
      %p170 = pneg %p169
    $region22: #{res_aspp2_forward.53} parent=5 // pred_check_branch
      %172 = sbr.rel (%p170) target = $region24
    $region23: #{res_aspp2_forward.53} parent=5 // pred_region
      // Predicated region
      $region25: #{res_aspp2_forward.53} parent=23 // pred_check
        %p173 = pneg %p44
      $region26: #{res_aspp2_forward.53} parent=23 // pred_check_branch
        %175 = sbr.rel (%p173) target = $region28
      $region27: #{res_aspp2_forward.53} parent=23 // pred_region
        %s176 = smul.u32 2, %s18
        %p177 = scmp.lt.s32.totalorder %s17, 1
        %s178 = scalar_select %p177, %s17, 1
        %p179 = scmp.lt.s32.totalorder %s176, 1
        %s180 = scalar_select %p179, %s176, 1
        %s181 = smul.addr %s178, 72
        %s182 = sadd.s32 %s180, %s181
        %s183 = smul.addr %s182, 8
        %s184 = scalar_lea.vmem %s0, %s183
        %s185 = smul.u32 2, %s18
      $region28: #{res_aspp2_forward.53} parent=23 // pred_fallthru
        _
      // Predicated region
      $region29: #{res_aspp2_forward.53} parent=23 // pred_check
        %p186 = pneg %p114
      $region30: #{res_aspp2_forward.53} parent=23 // pred_check_branch
        %188 = sbr.rel (%p186) target = $region32
      $region31: #{res_aspp2_forward.53} parent=23 // pred_region
        %s189 = smul.u32 2, %s18
        %p190 = scmp.lt.s32.totalorder %s17, 1
        %s191 = scalar_select %p190, %s17, 1
        %p192 = scmp.lt.s32.totalorder %s189, 1
        %s193 = scalar_select %p192, %s189, 1
        %s194 = smul.addr %s191, 2
        %s195 = sadd.s32 %s193, %s194
        %s196 = smul.addr %s195, 4
        %s197 = scalar_lea.vmem %s3, %s196
        %s198 = smul.u32 2, %s18
      $region32: #{res_aspp2_forward.53} parent=23 // pred_fallthru
        _
    $region24: #{res_aspp2_forward.53} parent=5 // pred_fallthru
      _
    %p199 = scmp.le.s32.totalorder 1, %s10
    %p200 = scmp.lt.s32.totalorder %s10, 3
    %p201 = pnand %p199, %p200
    %p202 = pneg %p201
    // Predicated region
    $region33: #{res_aspp2_forward.53} parent=5 // pred_check
      _
    $region34: #{res_aspp2_forward.53} parent=5 // pred_check_branch
      %204 = sbr.rel (%p201) target = $region36
    $region35: #{res_aspp2_forward.53} parent=5 // pred_region
      %s205 = ssub.s32 %s10, 1
      %s206 = smul.u32 2, %s20
      %p207 = scmp.lt.s32.totalorder %s19, 1
      %s208 = scalar_select %p207, %s19, 1
      %p209 = scmp.lt.s32.totalorder %s206, 1
      %s210 = scalar_select %p209, %s206, 1
      %s211 = smul.addr %s208, 72
      %s212 = sadd.s32 %s210, %s211
      %s213 = smul.addr %s212, 8
      %s214 = scalar_lea.vmem %s0, %s213
      %p215 = pneg %p50
      %p216 = pneg %p47
      %p217 = pneg %p71
      %p218 = pneg %p68
      %p219 = pneg %p92
      %p220 = pneg %p89
      %s221 = smul.u32 2, %s20
      %p222 = scmp.lt.s32.totalorder %s19, 1
      %s223 = scalar_select %p222, %s19, 1
      %p224 = scmp.lt.s32.totalorder %s221, 1
      %s225 = scalar_select %p224, %s221, 1
      %s226 = smul.addr %s223, 2
      %s227 = sadd.s32 %s225, %s226
      %s228 = smul.addr %s227, 4
      %s229 = scalar_lea.vmem %s3, %s228
      %p230 = pneg %p120
      %p231 = pneg %p117
      %p232 = pneg %p148
      %p233 = pneg %p145
      %s234 = smul.u32 2, %s20
      %p235 = scmp.lt.s32.totalorder %s19, 1
      %s236 = scalar_select %p235, %s19, 1
      %p237 = scmp.lt.s32.totalorder %s234, 1
      %s238 = scalar_select %p237, %s234, 1
      %s239 = smul.addr %s236, 2
      %s240 = sadd.s32 %s238, %s239
      %s241 = smul.addr %s240, 4
      %s242 = scalar_lea.vmem %s4, %s241
      %s243 = smul.u32 2, %s20
      %p244 = scmp.lt.s32.totalorder %s19, 1
      %s245 = scalar_select %p244, %s19, 1
      %p246 = scmp.lt.s32.totalorder %s243, 1
      %s247 = scalar_select %p246, %s243, 1
      %s248 = smul.addr %s245, 72
      %s249 = sadd.s32 %s247, %s248
      %s250 = smul.addr %s249, 8
      %s251 = scalar_lea.vmem %s0, %s250
      %s252 = smul.u32 2, %s20
      %s253 = smul.u32 2, %s20
      %p254 = scmp.lt.s32.totalorder %s19, 1
      %s255 = scalar_select %p254, %s19, 1
      %p256 = scmp.lt.s32.totalorder %s253, 1
      %s257 = scalar_select %p256, %s253, 1
      %s258 = smul.addr %s255, 2
      %s259 = sadd.s32 %s257, %s258
      %s260 = smul.addr %s259, 4
      %s261 = scalar_lea.vmem %s3, %s260
      %s262 = smul.u32 2, %s20
      %s263 = smul.u32 2, %s20
      %p264 = scmp.lt.s32.totalorder %s19, 1
      %s265 = scalar_select %p264, %s19, 1
      %p266 = scmp.lt.s32.totalorder %s263, 1
      %s267 = scalar_select %p266, %s263, 1
      %s268 = smul.addr %s265, 2
      %s269 = sadd.s32 %s267, %s268
      %s270 = smul.addr %s269, 4
      %s271 = scalar_lea.vmem %s4, %s270
      %s272 = smul.u32 2, %s20
      %v273 = vld [vmem:[%s1] sm:$0x77]
      %v274 = vld [vmem:[%s1 + $0x8] sm:$0x7]
      %v275 = vld [vmem:[%s251] sm:$0xff]
      %v276 = vld [vmem:[%s251 + $0x8] sm:$0xff]
      %v277 = vld [vmem:[%s251 + $0x10] sm:$0xff]
      %v278 = vld [vmem:[%s251 + $0x18] sm:$0xff]
      %v279 = vld [vmem:[%s251 + $0x20] sm:$0xff]
      %v280 = vld [vmem:[%s251 + $0x28] sm:$0xff]
      %v281 = vld [vmem:[%s251 + $0x30] sm:$0xff]
      %v282 = vld [vmem:[%s251 + $0x38] sm:$0xff]
      %v283 = vld [vmem:[%s251 + $0x40] sm:$0xff]
      %v284 = vld [vmem:[%s251 + $0x48] sm:$0xff]
      %v285 = vld [vmem:[%s251 + $0x50] sm:$0xff]
      %v286 = vld [vmem:[%s251 + $0x58] sm:$0xff]
      %v287 = vld [vmem:[%s251 + $0x60] sm:$0xff]
      %v288 = vld [vmem:[%s251 + $0x68] sm:$0xff]
      %v289 = vld [vmem:[%s251 + $0x70] sm:$0xff]
      %v290 = vld [vmem:[%s251 + $0x78] sm:$0xff]
      %v291 = vld [vmem:[%s251 + $0x80] sm:$0xff]
      %v292 = vld [vmem:[%s251 + $0x88] sm:$0xff]
      %v293 = vld [vmem:[%s251 + $0x90] sm:$0xff]
      %v294 = vld [vmem:[%s251 + $0x98] sm:$0xff]
      %v295 = vld [vmem:[%s251 + $0xa0] sm:$0xff]
      %v296 = vld [vmem:[%s251 + $0xa8] sm:$0xff]
      %v297 = vld [vmem:[%s251 + $0xb0] sm:$0xff]
      %v298 = vld [vmem:[%s251 + $0xb8] sm:$0xff]
      %v299 = vld [vmem:[%s251 + $0xc0] sm:$0xff]
      %v300 = vld [vmem:[%s251 + $0xc8] sm:$0xff]
      %v301 = vld [vmem:[%s251 + $0xd0] sm:$0xff]
      %v302 = vld [vmem:[%s251 + $0xd8] sm:$0xff]
      %v303 = vld [vmem:[%s251 + $0xe0] sm:$0xff]
      %v304 = vld [vmem:[%s251 + $0xe8] sm:$0xff]
      %v305 = vld [vmem:[%s251 + $0xf0] sm:$0xff]
      %v306 = vld [vmem:[%s251 + $0xf8] sm:$0xff]
      %v307 = vld [vmem:[%s251 + $0x100] sm:$0xff]
      %v308 = vld [vmem:[%s251 + $0x108] sm:$0xff]
      %v309 = vld [vmem:[%s251 + $0x110] sm:$0xff]
      %v310 = vld [vmem:[%s251 + $0x118] sm:$0xff]
      %v311 = vld [vmem:[%s251 + $0x120] sm:$0xff]
      %v312 = vld [vmem:[%s251 + $0x128] sm:$0xff]
      %v313 = vld [vmem:[%s251 + $0x130] sm:$0xff]
      %v314 = vld [vmem:[%s251 + $0x138] sm:$0xff]
      %v315 = vld [vmem:[%s251 + $0x140] sm:$0xff]
      %v316 = vld [vmem:[%s251 + $0x148] sm:$0xff]
      %v317 = vld [vmem:[%s251 + $0x150] sm:$0xff]
      %v318 = vld [vmem:[%s251 + $0x158] sm:$0xff]
      %v319 = vld [vmem:[%s251 + $0x160] sm:$0xff]
      %v320 = vld [vmem:[%s251 + $0x168] sm:$0xff]
      %v321 = vld [vmem:[%s251 + $0x170] sm:$0xff]
      %v322 = vld [vmem:[%s251 + $0x178] sm:$0xff]
      %v323 = vld [vmem:[%s251 + $0x180] sm:$0xff]
      %v324 = vld [vmem:[%s251 + $0x188] sm:$0xff]
      %v325 = vld [vmem:[%s251 + $0x190] sm:$0xff]
      %v326 = vld [vmem:[%s251 + $0x198] sm:$0xff]
      %v327 = vld [vmem:[%s251 + $0x1a0] sm:$0xff]
      %v328 = vld [vmem:[%s251 + $0x1a8] sm:$0xff]
      %v329 = vld [vmem:[%s251 + $0x1b0] sm:$0xff]
      %v330 = vld [vmem:[%s251 + $0x1b8] sm:$0xff]
      %v331 = vld [vmem:[%s251 + $0x1c0] sm:$0xff]
      %v332 = vld [vmem:[%s251 + $0x1c8] sm:$0xff]
      %v333 = vld [vmem:[%s251 + $0x1d0] sm:$0xff]
      %v334 = vld [vmem:[%s251 + $0x1d8] sm:$0xff]
      %v335 = vld [vmem:[%s251 + $0x1e0] sm:$0xff]
      %v336 = vld [vmem:[%s251 + $0x1e8] sm:$0xff]
      %v337 = vld [vmem:[%s251 + $0x1f0] sm:$0xff]
      %v338 = vld [vmem:[%s251 + $0x1f8] sm:$0xff]
      %v339 = vld [vmem:[%s251 + $0x200] sm:$0xff]
      %v340 = vld [vmem:[%s251 + $0x208] sm:$0xff]
      %v341 = vld [vmem:[%s251 + $0x210] sm:$0xff]
      %v342 = vld [vmem:[%s251 + $0x218] sm:$0xff]
      %v343 = vld [vmem:[%s251 + $0x220] sm:$0xff]
      %v344 = vld [vmem:[%s251 + $0x228] sm:$0xff]
      %v345 = vld [vmem:[%s251 + $0x230] sm:$0xff]
      %v346 = vld [vmem:[%s251 + $0x238] sm:$0xff]
      %v347 = vld [vmem:[%s2] sm:$0x7]
      %349 = vset.pattern.permute.xlu0 0
      %350 = vperm.xlu0 %349, %v347
      %v351 = vpop.permute.xlu0 %350
      %v355 = vcombine.high %v273, %v273
      %vm357 = vcmask 261120
      %v358 = vsel %vm357, %v274, 0
      %360 = vmatprep.subr.mxu0 %v306
      %361 = vmatpush1.msra.mxu0 %v305
      %362 = vmatprep.subr.mxu0 %v304
      %363 = vmatpush1.msra.mxu0 %v303
      %364 = vmatprep.subr.mxu0 %v302
      %365 = vmatpush1.msra.mxu0 %v301
      %366 = vmatprep.subr.mxu0 %v300
      %367 = vmatpush1.msra.mxu0 %v299
      %368 = vmatprep.subr.mxu0 %v298
      %369 = vmatpush1.msra.mxu0 %v297
      %370 = vmatprep.subr.mxu0 %v296
      %371 = vmatpush1.msra.mxu0 %v295
      %372 = vmatprep.subr.mxu0 %v294
      %373 = vmatpush1.msra.mxu0 %v293
      %374 = vmatprep.subr.mxu0 %v292
      %375 = vmatpush1.msra.mxu0 %v291
      %376 = vmatprep.subr.mxu0 %v290
      %377 = vmatpush1.msra.mxu0 %v289
      %378 = vmatprep.subr.mxu0 %v288
      %379 = vmatpush1.msra.mxu0 %v287
      %380 = vmatprep.subr.mxu0 %v286
      %381 = vmatpush1.msra.mxu0 %v285
      %382 = vmatprep.subr.mxu0 %v284
      %383 = vmatpush1.msra.mxu0 %v283
      %384 = vmatprep.subr.mxu0 %v282
      %385 = vmatpush1.msra.mxu0 %v281
      %386 = vmatprep.subr.mxu0 %v280
      %387 = vmatpush1.msra.mxu0 %v279
      %388 = vmatprep.subr.mxu0 %v278
      %389 = vmatpush1.msra.mxu0 %v277
      %390 = vmatprep.subr.mxu0 %v276
      %391 = vmatpush1.msra.mxu0 %v275
      %392 = vmatprep.subr.mxu0 %v338
      %393 = vmatpush2.msra.mxu0 %v337
      %394 = vmatprep.subr.mxu0 %v336
      %395 = vmatpush2.msra.mxu0 %v335
      %396 = vmatprep.subr.mxu0 %v334
      %397 = vmatpush2.msra.mxu0 %v333
      %398 = vmatprep.subr.mxu0 %v332
      %399 = vmatpush2.msra.mxu0 %v331
      %400 = vmatprep.subr.mxu0 %v330
      %401 = vmatpush2.msra.mxu0 %v329
      %402 = vmatprep.subr.mxu0 %v328
      %403 = vmatpush2.msra.mxu0 %v327
      %404 = vmatprep.subr.mxu0 %v326
      %405 = vmatpush2.msra.mxu0 %v325
      %406 = vmatprep.subr.mxu0 %v324
      %407 = vmatpush2.msra.mxu0 %v323
      %408 = vmatprep.subr.mxu0 %v322
      %409 = vmatpush2.msra.mxu0 %v321
      %410 = vmatprep.subr.mxu0 %v320
      %411 = vmatpush2.msra.mxu0 %v319
      %412 = vmatprep.subr.mxu0 %v318
      %413 = vmatpush2.msra.mxu0 %v317
      %414 = vmatprep.subr.mxu0 %v316
      %415 = vmatpush2.msra.mxu0 %v315
      %416 = vmatprep.subr.mxu0 %v314
      %417 = vmatpush2.msra.mxu0 %v313
      %418 = vmatprep.subr.mxu0 %v312
      %419 = vmatpush2.msra.mxu0 %v311
      %420 = vmatprep.subr.mxu0 %v310
      %421 = vmatpush2.msra.mxu0 %v309
      %422 = vmatprep.subr.mxu0 %v308
      %423 = vmatpush2.msra.mxu0 %v307
      %424 = vmatprep.mubr.f32.mxu0 %v355
      %425 = vmatmul.mubr.f32.gmra.mxu0 %v273
      %v426 = vpop.f32.mrf.mxu0
      %v427 = vadd.f32 %v351, %v426
      %v428 = vpop.f32.mrf.mxu0
      %v429 = vadd.f32 %v351, %v428
      %430 = vdwg.mxu0
      %431 = vmatprep.subr.mxu0 0.0
      %432 = vmatpush1.msra.mxu0 0.0
      %433 = vmatprep.subr.mxu0 0.0
      %434 = vmatpush1.msra.mxu0 0.0
      %435 = vmatprep.subr.mxu0 0.0
      %436 = vmatpush1.msra.mxu0 0.0
      %437 = vmatprep.subr.mxu0 0.0
      %438 = vmatpush1.msra.mxu0 0.0
      %439 = vmatprep.subr.mxu0 0.0
      %440 = vmatpush1.msra.mxu0 0.0
      %441 = vmatprep.subr.mxu0 0.0
      %442 = vmatpush1.msra.mxu0 0.0
      %443 = vmatprep.subr.mxu0 0.0
      %444 = vmatpush1.msra.mxu0 0.0
      %445 = vmatprep.subr.mxu0 0.0
      %446 = vmatpush1.msra.mxu0 0.0
      %447 = vmatprep.subr.mxu0 0.0
      %448 = vmatpush1.msra.mxu0 0.0
      %449 = vmatprep.subr.mxu0 0.0
      %450 = vmatpush1.msra.mxu0 0.0
      %451 = vmatprep.subr.mxu0 0.0
      %452 = vmatpush1.msra.mxu0 0.0
      %453 = vmatprep.subr.mxu0 0.0
      %454 = vmatpush1.msra.mxu0 0.0
      %455 = vmatprep.subr.mxu0 %v346
      %456 = vmatpush1.msra.mxu0 %v345
      %457 = vmatprep.subr.mxu0 %v344
      %458 = vmatpush1.msra.mxu0 %v343
      %459 = vmatprep.subr.mxu0 %v342
      %460 = vmatpush1.msra.mxu0 %v341
      %461 = vmatprep.subr.mxu0 %v340
      %462 = vmatpush1.msra.mxu0 %v339
      %463 = vmatprep.subr.mxu0 0.0
      %464 = vmatpush2.msra.mxu0 0.0
      %465 = vmatprep.subr.mxu0 0.0
      %466 = vmatpush2.msra.mxu0 0.0
      %467 = vmatprep.subr.mxu0 0.0
      %468 = vmatpush2.msra.mxu0 0.0
      %469 = vmatprep.subr.mxu0 0.0
      %470 = vmatpush2.msra.mxu0 0.0
      %471 = vmatprep.subr.mxu0 0.0
      %472 = vmatpush2.msra.mxu0 0.0
      %473 = vmatprep.subr.mxu0 0.0
      %474 = vmatpush2.msra.mxu0 0.0
      %475 = vmatprep.subr.mxu0 0.0
      %476 = vmatpush2.msra.mxu0 0.0
      %477 = vmatprep.subr.mxu0 0.0
      %478 = vmatpush2.msra.mxu0 0.0
      %479 = vmatprep.subr.mxu0 0.0
      %480 = vmatpush2.msra.mxu0 0.0
      %481 = vmatprep.subr.mxu0 0.0
      %482 = vmatpush2.msra.mxu0 0.0
      %483 = vmatprep.subr.mxu0 0.0
      %484 = vmatpush2.msra.mxu0 0.0
      %485 = vmatprep.subr.mxu0 0.0
      %486 = vmatpush2.msra.mxu0 0.0
      %487 = vmatprep.subr.mxu0 0.0
      %488 = vmatpush2.msra.mxu0 0.0
      %489 = vmatprep.subr.mxu0 0.0
      %490 = vmatpush2.msra.mxu0 0.0
      %491 = vmatprep.subr.mxu0 0.0
      %492 = vmatpush2.msra.mxu0 0.0
      %493 = vmatprep.subr.mxu0 0.0
      %494 = vmatpush2.msra.mxu0 0.0
      %495 = vmatprep.mubr.f32.mxu0 0.0
      %496 = vmatmul.mubr.f32.gmra.mxu0 %v358
      %v497 = vpop.f32.mrf.mxu0
      %v498 = vadd.f32 %v427, %v497
      %v499 = vpop.f32.mrf.mxu0
      %v500 = vadd.f32 %v429, %v499
      %501 = vdwg.mxu0
      %v502 = vmax.f32 %v498, 0.0
      %v503 = vmax.f32 %v500, 0.0
      %v504 = vld [vmem:[%s261] sm:$0x77]
      %v506 = vcombine.high %v504, %v504
      %v508 = vadd.f32 %v502, %v504
      %v509 = vadd.f32 %v503, %v506
      %v512 = vcombine.low %v508, %v509
      %514 = vst [vmem:[%s271] sm:$0x77] %v512
      %s515 = smul.u32 2, %s20
      %p516 = scmp.lt.s32.totalorder %s19, 1
      %s517 = scalar_select %p516, %s19, 1
      %p518 = scmp.lt.s32.totalorder %s515, 1
      %s519 = scalar_select %p518, %s515, 1
      %s520 = smul.addr %s517, 2
      %s521 = sadd.s32 %s519, %s520
      %s522 = smul.addr %s521, 4
      %s523 = scalar_lea.vmem %s4, %s522
      // Predicated region
      $region37: #{res_aspp2_forward.53} parent=35 // pred_check
        %p524 = pneg %p145
      $region38: #{res_aspp2_forward.53} parent=35 // pred_check_branch
        %526 = sbr.rel (%p524) target = $region40
      $region39: #{res_aspp2_forward.53} parent=35 // pred_region
        %s527 = smul.u32 2, %s20
      $region40: #{res_aspp2_forward.53} parent=35 // pred_fallthru
        _
    $region36: #{res_aspp2_forward.53} parent=5 // pred_fallthru
      _
    %p528 = scmp.le.s32.totalorder 2, %s10
    // Predicated region
    $region41: #{res_aspp2_forward.53} parent=5 // pred_check
      %p529 = pneg %p528
    $region42: #{res_aspp2_forward.53} parent=5 // pred_check_branch
      %531 = sbr.rel (%p529) target = $region44
    $region43: #{res_aspp2_forward.53} parent=5 // pred_region
      %s532 = ssub.s32 %s10, 2
      // Predicated region
      $region45: #{res_aspp2_forward.53} parent=43 // pred_check
        %p533 = pneg %p151
      $region46: #{res_aspp2_forward.53} parent=43 // pred_check_branch
        %535 = sbr.rel (%p533) target = $region48
      $region47: #{res_aspp2_forward.53} parent=43 // pred_region
        %s536 = smul.u32 2, %s22
        %p537 = scmp.lt.s32.totalorder %s21, 1
        %s538 = scalar_select %p537, %s21, 1
        %p539 = scmp.lt.s32.totalorder %s536, 1
        %s540 = scalar_select %p539, %s536, 1
        %s541 = smul.addr %s538, 2
        %s542 = sadd.s32 %s540, %s541
        %s543 = smul.addr %s542, 4
        %s544 = scalar_lea.vmem %s4, %s543
      $region48: #{res_aspp2_forward.53} parent=43 // pred_fallthru
        _
    $region44: #{res_aspp2_forward.53} parent=5 // pred_fallthru
      _
  $region6: #{res_aspp2_forward.53} parent=0 // loop_footer
    %s14 = sadd.s32 1, %s10
  $region7: #{res_aspp2_forward.53} parent=0 // loop_footer_branch
    %9 = sbr.rel target = $region3
  $region8: #{res_aspp2_forward.53} parent=0 // loop_exit
    _

</llo_original>
